<compile_context>
chip_gen: v7x
topology: tpu7x:2x2x1
jax: 0.10.0
libtpu: 0.0.40
codegen_flags: <defaults>
</compile_context>

<pallas_src>
import jax
import jax.numpy as jnp
import numpy as np
from jax.experimental import pallas as pl
from jax.experimental.pallas import tpu as pltpu


def _gate_filter_kernel(x1_ref, x2_ref, x3_ref, wf_ref, wo_ref, bf_ref, bo_ref,
                        o1_ref, o2_ref, o3_ref):
    # x*_ref : (TM, D)      activations (bf16 by default)
    # wf_ref : (3, D, 2D)   N-packed filter weights: [W3|W5], [W1|W6], [W2|W4]
    # wo_ref : (3, D, D)    output-head weights: W7, W8, W9
    # bf_ref : (3, 1, D)    pre-summed filter biases: b1+b2, b3+b4, b5+b6 (f32)
    # bo_ref : (3, 1, D)    output-head biases: b7, b8, b9 (f32)
    D = x1_ref.shape[1]
    mxu_dtype = wf_ref.dtype

    def mm(x, w):
        # (TM, D) @ (D, N) on the MXU with f32 accumulation.
        return jnp.dot(x, w, preferred_element_type=jnp.float32)

    # Filter-stage matmuls, N-packed: each input hits two filter weights at once.
    p1 = mm(x1_ref[...], wf_ref[0])          # [x1@W3 | x1@W5]
    p2 = mm(x2_ref[...], wf_ref[1])          # [x2@W1 | x2@W6]

    # branch 3: x3_out = relu(L9(tanh(L5(x1) + L6(x2)) * x3))
    f3 = jnp.tanh(p1[:, D:] + p2[:, D:] + bf_ref[2])
    g3 = (f3 * x3_ref[...].astype(jnp.float32)).astype(mxu_dtype)
    o3_ref[...] = jnp.maximum(mm(g3, wo_ref[2]) + bo_ref[2], 0.0).astype(o3_ref.dtype)

    p3 = mm(x3_ref[...], wf_ref[2])          # [x3@W2 | x3@W4]

    # branch 1: x1_out = relu(L7(x1 * tanh(L1(x2) + L2(x3))))
    f1 = jnp.tanh(p2[:, :D] + p3[:, :D] + bf_ref[0])
    g1 = (x1_ref[...].astype(jnp.float32) * f1).astype(mxu_dtype)
    o1_ref[...] = jnp.maximum(mm(g1, wo_ref[0]) + bo_ref[0], 0.0).astype(o1_ref.dtype)

    # branch 2: x2_out = relu(L8(tanh(L3(x1) + L4(x3)) * x2))
    f2 = jnp.tanh(p1[:, :D] + p3[:, D:] + bf_ref[1])
    g2 = (f2 * x2_ref[...].astype(jnp.float32)).astype(mxu_dtype)
    o2_ref[...] = jnp.maximum(mm(g2, wo_ref[1]) + bo_ref[1], 0.0).astype(o2_ref.dtype)


def _pick_row_tile(B, max_tile=512):
    """Largest sublane-aligned divisor of B up to `max_tile`.

    Prefers >=4 grid steps (v7x megacore sharding + DMA pipelining) when that
    still allows >=128-row tiles; tiny batches fall back to a single tile.
    """
    if B % 8 != 0 or B <= 8:
        return B
    divisors = [t for t in range(8, min(B, max_tile) + 1, 8) if B % t == 0]
    if not divisors:
        return B
    big_and_multi = [t for t in divisors if B // t >= 4 and t >= 128]
    if big_and_multi:
        return max(big_and_multi)
    return max(divisors)


def gate_filter_forward(x1, x2, x3, weights, biases, *, tm=None,
                        compute_dtype=jnp.bfloat16):
    """GateFilter forward.

    x1, x2, x3 : (B, D) float32
    weights    : list of 9 (D, D) arrays in (in, out) layout [L1 .. L9]
    biases     : list of 9 (D,) arrays (same order)
    Returns (x1_out, x2_out, x3_out), each (B, D) float32.
    """
    B, D = x1.shape
    Wl = [jnp.asarray(w, jnp.float32) for w in weights]
    bl = [jnp.asarray(b, jnp.float32) for b in biases]

    # N-packed filter weights (3, D, 2D), output-head weights (3, D, D).
    Wf = jnp.stack([
        jnp.concatenate([Wl[2], Wl[4]], axis=1),   # applied to x1 -> [W3 | W5]
        jnp.concatenate([Wl[0], Wl[5]], axis=1),   # applied to x2 -> [W1 | W6]
        jnp.concatenate([Wl[1], Wl[3]], axis=1),   # applied to x3 -> [W2 | W4]
    ]).astype(compute_dtype)
    Wo = jnp.stack([Wl[6], Wl[7], Wl[8]]).astype(compute_dtype)
    bf = jnp.stack([bl[0] + bl[1], bl[2] + bl[3], bl[4] + bl[5]]).reshape(3, 1, D)
    bo = jnp.stack([bl[6], bl[7], bl[8]]).reshape(3, 1, D)

    if tm is None:
        tm = _pick_row_tile(B)
    assert B % tm == 0, "batch must be divisible by the row tile"
    grid = (B // tm,)

    x_itemsize = jnp.dtype(compute_dtype).itemsize
    w_itemsize = jnp.dtype(compute_dtype).itemsize

    # Resident-footprint estimate (weights/biases + double-buffered activation
    # tiles + packed intermediates); only raise the VMEM limit when needed.
    w_bytes = 9 * D * D * w_itemsize
    b_bytes = 6 * D * 4
    act_bytes = 3 * tm * D * x_itemsize + 3 * tm * D * 4
    vmem_estimate = 2 * (w_bytes + b_bytes + act_bytes) + 10 * tm * D * 4
    compiler_kwargs = {}
    if vmem_estimate > 24 * 1024 * 1024:
        # TODO(synk): for very large D the resident weight stack should be
        # K/N-tiled over an extra "arbitrary" grid axis instead of raising the
        # limit; the cap keeps us inside v7x's 64 MiB physical VMEM.
        compiler_kwargs["vmem_limit_bytes"] = int(
            min(vmem_estimate * 1.25, 64 * 1024 * 1024))

    cost = pl.CostEstimate(
        flops=9 * 2 * B * D * D,
        transcendentals=3 * B * D,
        bytes_accessed=(3 * B * D * x_itemsize      # inputs
                        + 3 * B * D * 4             # outputs (f32)
                        + 9 * D * D * w_itemsize    # weights
                        + 6 * D * 4),               # biases
    )

    row_spec = pl.BlockSpec((tm, D), lambda i: (i, 0))

    o1, o2, o3 = pl.pallas_call(
        _gate_filter_kernel,
        out_shape=(
            jax.ShapeDtypeStruct((B, D), jnp.float32),
            jax.ShapeDtypeStruct((B, D), jnp.float32),
            jax.ShapeDtypeStruct((B, D), jnp.float32),
        ),
        grid_spec=pltpu.PrefetchScalarGridSpec(
            num_scalar_prefetch=0,
            grid=grid,
            in_specs=[
                row_spec,                                          # x1 tile
                row_spec,                                          # x2 tile
                row_spec,                                          # x3 tile
                pl.BlockSpec((3, D, 2 * D), lambda i: (0, 0, 0)),  # filter W (resident)
                pl.BlockSpec((3, D, D), lambda i: (0, 0, 0)),      # head W   (resident)
                pl.BlockSpec((3, 1, D), lambda i: (0, 0, 0)),      # filter b (resident)
                pl.BlockSpec((3, 1, D), lambda i: (0, 0, 0)),      # head b   (resident)
            ],
            out_specs=[row_spec, row_spec, row_spec],
        ),
        compiler_params=pltpu.CompilerParams(
            dimension_semantics=("parallel",), **compiler_kwargs),
        cost_estimate=cost,
    )(x1.astype(compute_dtype), x2.astype(compute_dtype), x3.astype(compute_dtype),
      Wf, Wo, bf, bo)
    return o1, o2, o3


def _reference_forward(x1, x2, x3, weights, biases, *, mxu_dtype=jnp.float32):
    """Pure-JAX reference.  mxu_dtype emulates the kernel's MXU-input rounding
    (cast to mxu_dtype, back to f32, then f32 matmul)."""
    def q(v):
        return v.astype(mxu_dtype).astype(jnp.float32)

    W = [q(jnp.asarray(w, jnp.float32)) for w in weights]
    b = [jnp.asarray(v, jnp.float32) for v in biases]
    x1q, x2q, x3q = q(x1), q(x2), q(x3)
    hi = jax.lax.Precision.HIGHEST

    def lin(x, k):
        return jnp.dot(x, W[k], precision=hi) + b[k]

    f1 = jnp.tanh(lin(x2q, 0) + lin(x3q, 1))
    o1 = jax.nn.relu(jnp.dot(q(x1q * f1), W[6], precision=hi) + b[6])
    f2 = jnp.tanh(lin(x1q, 2) + lin(x3q, 3))
    o2 = jax.nn.relu(jnp.dot(q(f2 * x2q), W[7], precision=hi) + b[7])
    f3 = jnp.tanh(lin(x1q, 4) + lin(x2q, 5))
    o3 = jax.nn.relu(jnp.dot(q(f3 * x3q), W[8], precision=hi) + b[8])
    return o1, o2, o3


if __name__ == "__main__":
    key = jax.random.PRNGKey(0)
    B, D = 512, 128                    # batch=512 rows, in_size=128 (lane-aligned)
    keys = jax.random.split(key, 21)

    x1 = jax.random.normal(keys[0], (B, D), dtype=jnp.float32)
    x2 = jax.random.normal(keys[1], (B, D), dtype=jnp.float32)
    x3 = jax.random.normal(keys[2], (B, D), dtype=jnp.float32)

    scale = 1.0 / np.sqrt(D)
    weights = [scale * jax.random.normal(keys[3 + i], (D, D), dtype=jnp.float32)
               for i in range(9)]
    biases = [scale * jax.random.normal(keys[12 + i], (D,), dtype=jnp.float32)
              for i in range(9)]

    o1, o2, o3 = gate_filter_forward(x1, x2, x3, weights, biases)
    o1, o2, o3 = jax.block_until_ready((o1, o2, o3))

    # Tight check against a reference that applies the same bf16 MXU-input
    # rounding (remaining differences are only f32 accumulation order).
    rq1, rq2, rq3 = _reference_forward(x1, x2, x3, weights, biases,
                                       mxu_dtype=jnp.bfloat16)
    for o, r in ((o1, rq1), (o2, rq2), (o3, rq3)):
        np.testing.assert_allclose(np.asarray(o), np.asarray(r),
                                   rtol=2e-3, atol=2e-3)

    # Sanity check against the full-f32 reference (bf16 input rounding dominates).
    rf1, rf2, rf3 = _reference_forward(x1, x2, x3, weights, biases,
                                       mxu_dtype=jnp.float32)
    for o, r in ((o1, rf1), (o2, rf2), (o3, rf3)):
        np.testing.assert_allclose(np.asarray(o), np.asarray(r),
                                   rtol=1e-1, atol=1e-1)

    print("KERNEL_OK")
</pallas_src>

<mosaic_0001>
module attributes {stable_mosaic.version = 11 : i64} {
  func.func @_gate_filter_kernel(%arg0: i32, %arg1: memref<128x128xbf16, #tpu.memory_space<vmem>>, %arg2: memref<128x128xbf16, #tpu.memory_space<vmem>>, %arg3: memref<128x128xbf16, #tpu.memory_space<vmem>>, %arg4: memref<3x128x256xbf16, #tpu.memory_space<vmem>>, %arg5: memref<3x128x128xbf16, #tpu.memory_space<vmem>>, %arg6: memref<3x1x128xf32, #tpu.memory_space<vmem>>, %arg7: memref<3x1x128xf32, #tpu.memory_space<vmem>>, %arg8: memref<128x128xf32, #tpu.memory_space<vmem>>, %arg9: memref<128x128xf32, #tpu.memory_space<vmem>>, %arg10: memref<128x128xf32, #tpu.memory_space<vmem>>) attributes {dimension_semantics = [#tpu.dimension_semantics<parallel>], iteration_bounds = array<i64: 4>, scalar_prefetch = 0 : i64, scratch_operands = 0 : i64, tpu.core_type = #tpu.core_type<tc>, window_params = [{transform_indices = @transform_0, window_bounds = array<i64: 128, 128>}, {transform_indices = @transform_1, window_bounds = array<i64: 128, 128>}, {transform_indices = @transform_2, window_bounds = array<i64: 128, 128>}, {pipeline_mode = #tpu.pipeline_mode<synchronous>, transform_indices = @transform_3, window_bounds = array<i64: 3, 128, 256>}, {pipeline_mode = #tpu.pipeline_mode<synchronous>, transform_indices = @transform_4, window_bounds = array<i64: 3, 128, 128>}, {pipeline_mode = #tpu.pipeline_mode<synchronous>, transform_indices = @transform_5, window_bounds = array<i64: 3, 1, 128>}, {pipeline_mode = #tpu.pipeline_mode<synchronous>, transform_indices = @transform_6, window_bounds = array<i64: 3, 1, 128>}, {transform_indices = @transform_7, window_bounds = array<i64: 128, 128>}, {transform_indices = @transform_8, window_bounds = array<i64: 128, 128>}, {transform_indices = @transform_9, window_bounds = array<i64: 128, 128>}]} {
    %c0 = arith.constant 0 : index
    %c0_0 = arith.constant 0 : index
    %0 = vector.load %arg1[%c0, %c0_0] : memref<128x128xbf16, #tpu.memory_space<vmem>>, vector<128x128xbf16>
    %c0_1 = arith.constant 0 : index
    %c0_2 = arith.constant 0 : index
    %c0_3 = arith.constant 0 : index
    %1 = vector.load %arg4[%c0_1, %c0_2, %c0_3] : memref<3x128x256xbf16, #tpu.memory_space<vmem>>, vector<1x128x256xbf16>
    %2 = vector.shape_cast %1 : vector<1x128x256xbf16> to vector<128x256xbf16>
    %cst = arith.constant dense<0.000000e+00> : vector<128x256xf32>
    %3 = tpu.matmul %0, %2, %cst {dimension_numbers = #tpu.dot_dimension_numbers<[1], [0], [0], [1], [0, 0, 1, 1], [], []>} : vector<128x128xbf16>, vector<128x256xbf16>, vector<128x256xf32> -> vector<128x256xf32>
    %c0_4 = arith.constant 0 : index
    %c0_5 = arith.constant 0 : index
    %4 = vector.load %arg2[%c0_4, %c0_5] : memref<128x128xbf16, #tpu.memory_space<vmem>>, vector<128x128xbf16>
    %c1 = arith.constant 1 : index
    %c0_6 = arith.constant 0 : index
    %c0_7 = arith.constant 0 : index
    %5 = vector.load %arg4[%c1, %c0_6, %c0_7] : memref<3x128x256xbf16, #tpu.memory_space<vmem>>, vector<1x128x256xbf16>
    %6 = vector.shape_cast %5 : vector<1x128x256xbf16> to vector<128x256xbf16>
    %cst_8 = arith.constant dense<0.000000e+00> : vector<128x256xf32>
    %7 = tpu.matmul %4, %6, %cst_8 {dimension_numbers = #tpu.dot_dimension_numbers<[1], [0], [0], [1], [0, 0, 1, 1], [], []>} : vector<128x128xbf16>, vector<128x256xbf16>, vector<128x256xf32> -> vector<128x256xf32>
    %8 = vector.extract_strided_slice %3 {offsets = [0, 128], sizes = [128, 128], strides = [1, 1]} : vector<128x256xf32> to vector<128x128xf32>
    %9 = vector.extract_strided_slice %7 {offsets = [0, 128], sizes = [128, 128], strides = [1, 1]} : vector<128x256xf32> to vector<128x128xf32>
    %10 = arith.addf %8, %9 : vector<128x128xf32>
    %c2 = arith.constant 2 : index
    %c0_9 = arith.constant 0 : index
    %c0_10 = arith.constant 0 : index
    %11 = vector.load %arg6[%c2, %c0_9, %c0_10] : memref<3x1x128xf32, #tpu.memory_space<vmem>>, vector<1x1x128xf32>
    %12 = vector.shape_cast %11 : vector<1x1x128xf32> to vector<1x128xf32>
    %13 = vector.broadcast %12 : vector<1x128xf32> to vector<128x128xf32>
    %14 = arith.addf %10, %13 : vector<128x128xf32>
    %15 = math.tanh %14 : vector<128x128xf32>
    %c0_11 = arith.constant 0 : index
    %c0_12 = arith.constant 0 : index
    %16 = vector.load %arg3[%c0_11, %c0_12] : memref<128x128xbf16, #tpu.memory_space<vmem>>, vector<128x128xbf16>
    %17 = arith.extf %16 : vector<128x128xbf16> to vector<128x128xf32>
    %18 = arith.mulf %15, %17 : vector<128x128xf32>
    %19 = arith.truncf %18 : vector<128x128xf32> to vector<128x128xbf16>
    %c2_13 = arith.constant 2 : index
    %c0_14 = arith.constant 0 : index
    %c0_15 = arith.constant 0 : index
    %20 = vector.load %arg5[%c2_13, %c0_14, %c0_15] : memref<3x128x128xbf16, #tpu.memory_space<vmem>>, vector<1x128x128xbf16>
    %21 = vector.shape_cast %20 : vector<1x128x128xbf16> to vector<128x128xbf16>
    %cst_16 = arith.constant dense<0.000000e+00> : vector<128x128xf32>
    %22 = tpu.matmul %19, %21, %cst_16 {dimension_numbers = #tpu.dot_dimension_numbers<[1], [0], [0], [1], [0, 0, 1, 1], [], []>} : vector<128x128xbf16>, vector<128x128xbf16>, vector<128x128xf32> -> vector<128x128xf32>
    %c2_17 = arith.constant 2 : index
    %c0_18 = arith.constant 0 : index
    %c0_19 = arith.constant 0 : index
    %23 = vector.load %arg7[%c2_17, %c0_18, %c0_19] : memref<3x1x128xf32, #tpu.memory_space<vmem>>, vector<1x1x128xf32>
    %24 = vector.shape_cast %23 : vector<1x1x128xf32> to vector<1x128xf32>
    %25 = vector.broadcast %24 : vector<1x128xf32> to vector<128x128xf32>
    %26 = arith.addf %22, %25 : vector<128x128xf32>
    %cst_20 = arith.constant 0.000000e+00 : f32
    %27 = vector.broadcast %cst_20 : f32 to vector<128x128xf32>
    %28 = arith.maximumf %26, %27 : vector<128x128xf32>
    %c0_21 = arith.constant 0 : index
    %c0_22 = arith.constant 0 : index
    %29 = vector.load %arg10[%c0_21, %c0_22] : memref<128x128xf32, #tpu.memory_space<vmem>>, vector<128x128xf32>
    tpu.vector_store %arg10[%c0_21, %c0_22], %28 {strides = array<i32>} : memref<128x128xf32, #tpu.memory_space<vmem>>, vector<128x128xf32>,
    %c0_23 = arith.constant 0 : index
    %c0_24 = arith.constant 0 : index
    %30 = vector.load %arg3[%c0_23, %c0_24] : memref<128x128xbf16, #tpu.memory_space<vmem>>, vector<128x128xbf16>
    %c2_25 = arith.constant 2 : index
    %c0_26 = arith.constant 0 : index
    %c0_27 = arith.constant 0 : index
    %31 = vector.load %arg4[%c2_25, %c0_26, %c0_27] : memref<3x128x256xbf16, #tpu.memory_space<vmem>>, vector<1x128x256xbf16>
    %32 = vector.shape_cast %31 : vector<1x128x256xbf16> to vector<128x256xbf16>
    %cst_28 = arith.constant dense<0.000000e+00> : vector<128x256xf32>
    %33 = tpu.matmul %30, %32, %cst_28 {dimension_numbers = #tpu.dot_dimension_numbers<[1], [0], [0], [1], [0, 0, 1, 1], [], []>} : vector<128x128xbf16>, vector<128x256xbf16>, vector<128x256xf32> -> vector<128x256xf32>
    %34 = vector.extract_strided_slice %7 {offsets = [0, 0], sizes = [128, 128], strides = [1, 1]} : vector<128x256xf32> to vector<128x128xf32>
    %35 = vector.extract_strided_slice %33 {offsets = [0, 0], sizes = [128, 128], strides = [1, 1]} : vector<128x256xf32> to vector<128x128xf32>
    %36 = arith.addf %34, %35 : vector<128x128xf32>
    %c0_29 = arith.constant 0 : index
    %c0_30 = arith.constant 0 : index
    %c0_31 = arith.constant 0 : index
    %37 = vector.load %arg6[%c0_29, %c0_30, %c0_31] : memref<3x1x128xf32, #tpu.memory_space<vmem>>, vector<1x1x128xf32>
    %38 = vector.shape_cast %37 : vector<1x1x128xf32> to vector<1x128xf32>
    %39 = vector.broadcast %38 : vector<1x128xf32> to vector<128x128xf32>
    %40 = arith.addf %36, %39 : vector<128x128xf32>
    %41 = math.tanh %40 : vector<128x128xf32>
    %c0_32 = arith.constant 0 : index
    %c0_33 = arith.constant 0 : index
    %42 = vector.load %arg1[%c0_32, %c0_33] : memref<128x128xbf16, #tpu.memory_space<vmem>>, vector<128x128xbf16>
    %43 = arith.extf %42 : vector<128x128xbf16> to vector<128x128xf32>
    %44 = arith.mulf %43, %41 : vector<128x128xf32>
    %45 = arith.truncf %44 : vector<128x128xf32> to vector<128x128xbf16>
    %c0_34 = arith.constant 0 : index
    %c0_35 = arith.constant 0 : index
    %c0_36 = arith.constant 0 : index
    %46 = vector.load %arg5[%c0_34, %c0_35, %c0_36] : memref<3x128x128xbf16, #tpu.memory_space<vmem>>, vector<1x128x128xbf16>
    %47 = vector.shape_cast %46 : vector<1x128x128xbf16> to vector<128x128xbf16>
    %cst_37 = arith.constant dense<0.000000e+00> : vector<128x128xf32>
    %48 = tpu.matmul %45, %47, %cst_37 {dimension_numbers = #tpu.dot_dimension_numbers<[1], [0], [0], [1], [0, 0, 1, 1], [], []>} : vector<128x128xbf16>, vector<128x128xbf16>, vector<128x128xf32> -> vector<128x128xf32>
    %c0_38 = arith.constant 0 : index
    %c0_39 = arith.constant 0 : index
    %c0_40 = arith.constant 0 : index
    %49 = vector.load %arg7[%c0_38, %c0_39, %c0_40] : memref<3x1x128xf32, #tpu.memory_space<vmem>>, vector<1x1x128xf32>
    %50 = vector.shape_cast %49 : vector<1x1x128xf32> to vector<1x128xf32>
    %51 = vector.broadcast %50 : vector<1x128xf32> to vector<128x128xf32>
    %52 = arith.addf %48, %51 : vector<128x128xf32>
    %cst_41 = arith.constant 0.000000e+00 : f32
    %53 = vector.broadcast %cst_41 : f32 to vector<128x128xf32>
    %54 = arith.maximumf %52, %53 : vector<128x128xf32>
    %c0_42 = arith.constant 0 : index
    %c0_43 = arith.constant 0 : index
    %55 = vector.load %arg8[%c0_42, %c0_43] : memref<128x128xf32, #tpu.memory_space<vmem>>, vector<128x128xf32>
    tpu.vector_store %arg8[%c0_42, %c0_43], %54 {strides = array<i32>} : memref<128x128xf32, #tpu.memory_space<vmem>>, vector<128x128xf32>,
    %56 = vector.extract_strided_slice %3 {offsets = [0, 0], sizes = [128, 128], strides = [1, 1]} : vector<128x256xf32> to vector<128x128xf32>
    %57 = vector.extract_strided_slice %33 {offsets = [0, 128], sizes = [128, 128], strides = [1, 1]} : vector<128x256xf32> to vector<128x128xf32>
    %58 = arith.addf %56, %57 : vector<128x128xf32>
    %c1_44 = arith.constant 1 : index
    %c0_45 = arith.constant 0 : index
    %c0_46 = arith.constant 0 : index
    %59 = vector.load %arg6[%c1_44, %c0_45, %c0_46] : memref<3x1x128xf32, #tpu.memory_space<vmem>>, vector<1x1x128xf32>
    %60 = vector.shape_cast %59 : vector<1x1x128xf32> to vector<1x128xf32>
    %61 = vector.broadcast %60 : vector<1x128xf32> to vector<128x128xf32>
    %62 = arith.addf %58, %61 : vector<128x128xf32>
    %63 = math.tanh %62 : vector<128x128xf32>
    %c0_47 = arith.constant 0 : index
    %c0_48 = arith.constant 0 : index
    %64 = vector.load %arg2[%c0_47, %c0_48] : memref<128x128xbf16, #tpu.memory_space<vmem>>, vector<128x128xbf16>
    %65 = arith.extf %64 : vector<128x128xbf16> to vector<128x128xf32>
    %66 = arith.mulf %63, %65 : vector<128x128xf32>
    %67 = arith.truncf %66 : vector<128x128xf32> to vector<128x128xbf16>
    %c1_49 = arith.constant 1 : index
    %c0_50 = arith.constant 0 : index
    %c0_51 = arith.constant 0 : index
    %68 = vector.load %arg5[%c1_49, %c0_50, %c0_51] : memref<3x128x128xbf16, #tpu.memory_space<vmem>>, vector<1x128x128xbf16>
    %69 = vector.shape_cast %68 : vector<1x128x128xbf16> to vector<128x128xbf16>
    %cst_52 = arith.constant dense<0.000000e+00> : vector<128x128xf32>
    %70 = tpu.matmul %67, %69, %cst_52 {dimension_numbers = #tpu.dot_dimension_numbers<[1], [0], [0], [1], [0, 0, 1, 1], [], []>} : vector<128x128xbf16>, vector<128x128xbf16>, vector<128x128xf32> -> vector<128x128xf32>
    %c1_53 = arith.constant 1 : index
    %c0_54 = arith.constant 0 : index
    %c0_55 = arith.constant 0 : index
    %71 = vector.load %arg7[%c1_53, %c0_54, %c0_55] : memref<3x1x128xf32, #tpu.memory_space<vmem>>, vector<1x1x128xf32>
    %72 = vector.shape_cast %71 : vector<1x1x128xf32> to vector<1x128xf32>
    %73 = vector.broadcast %72 : vector<1x128xf32> to vector<128x128xf32>
    %74 = arith.addf %70, %73 : vector<128x128xf32>
    %cst_56 = arith.constant 0.000000e+00 : f32
    %75 = vector.broadcast %cst_56 : f32 to vector<128x128xf32>
    %76 = arith.maximumf %74, %75 : vector<128x128xf32>
    %c0_57 = arith.constant 0 : index
    %c0_58 = arith.constant 0 : index
    %77 = vector.load %arg9[%c0_57, %c0_58] : memref<128x128xf32, #tpu.memory_space<vmem>>, vector<128x128xf32>
    tpu.vector_store %arg9[%c0_57, %c0_58], %76 {strides = array<i32>} : memref<128x128xf32, #tpu.memory_space<vmem>>, vector<128x128xf32>,
    return
  }
  func.func @transform_0(%arg0: i32) -> (i32, i32) {
    %c0_i32 = arith.constant 0 : i32
    %c0_i32_0 = arith.constant 0 : i32
    return %arg0, %c0_i32 : i32, i32
  }
  func.func @transform_1(%arg0: i32) -> (i32, i32) {
    %c0_i32 = arith.constant 0 : i32
    %c0_i32_0 = arith.constant 0 : i32
    return %arg0, %c0_i32 : i32, i32
  }
  func.func @transform_2(%arg0: i32) -> (i32, i32) {
    %c0_i32 = arith.constant 0 : i32
    %c0_i32_0 = arith.constant 0 : i32
    return %arg0, %c0_i32 : i32, i32
  }
  func.func @transform_3(%arg0: i32) -> (i32, i32, i32) {
    %c0_i32 = arith.constant 0 : i32
    %c0_i32_0 = arith.constant 0 : i32
    %c0_i32_1 = arith.constant 0 : i32
    %c0_i32_2 = arith.constant 0 : i32
    return %c0_i32, %c0_i32_0, %c0_i32_1 : i32, i32, i32
  }
  func.func @transform_4(%arg0: i32) -> (i32, i32, i32) {
    %c0_i32 = arith.constant 0 : i32
    %c0_i32_0 = arith.constant 0 : i32
    %c0_i32_1 = arith.constant 0 : i32
    %c0_i32_2 = arith.constant 0 : i32
    return %c0_i32, %c0_i32_0, %c0_i32_1 : i32, i32, i32
  }
  func.func @transform_5(%arg0: i32) -> (i32, i32, i32) {
    %c0_i32 = arith.constant 0 : i32
    %c0_i32_0 = arith.constant 0 : i32
    %c0_i32_1 = arith.constant 0 : i32
    %c0_i32_2 = arith.constant 0 : i32
    return %c0_i32, %c0_i32_0, %c0_i32_1 : i32, i32, i32
  }
  func.func @transform_6(%arg0: i32) -> (i32, i32, i32) {
    %c0_i32 = arith.constant 0 : i32
    %c0_i32_0 = arith.constant 0 : i32
    %c0_i32_1 = arith.constant 0 : i32
    %c0_i32_2 = arith.constant 0 : i32
    return %c0_i32, %c0_i32_0, %c0_i32_1 : i32, i32, i32
  }
  func.func @transform_7(%arg0: i32) -> (i32, i32) {
    %c0_i32 = arith.constant 0 : i32
    %c0_i32_0 = arith.constant 0 : i32
    return %arg0, %c0_i32 : i32, i32
  }
  func.func @transform_8(%arg0: i32) -> (i32, i32) {
    %c0_i32 = arith.constant 0 : i32
    %c0_i32_0 = arith.constant 0 : i32
    return %arg0, %c0_i32 : i32, i32
  }
  func.func @transform_9(%arg0: i32) -> (i32, i32) {
    %c0_i32 = arith.constant 0 : i32
    %c0_i32_0 = arith.constant 0 : i32
    return %arg0, %c0_i32 : i32, i32
  }
}

</mosaic_0001>

<llo_original>
// kernel: tpu_custom_call.1
$region0: #{tpu_custom_call.1}
  #allocation0 [shape = 'u32[]', space=smem, size = 0x4, offset = 0x4, fixed_abs, tag = 'smem constant byte address 0x4 - core index']
  #allocation1 [shape = 'u32[144,128]{1,0:T(1,128)}', space=vmem, size = 0x12000, scoped, tag = 'internal scratch']
  %s0 = inlined_call_operand.hbm [shape: bf16[512,128], index: 0, kind: input, shape index: {}]
  %s1 = inlined_call_operand.hbm [shape: bf16[512,128], index: 1, kind: input, shape index: {}]
  %s2 = inlined_call_operand.hbm [shape: bf16[512,128], index: 2, kind: input, shape index: {}]
  %s3 = inlined_call_operand.hbm [shape: bf16[3,128,256], index: 3, kind: input, shape index: {}]
  %s4 = inlined_call_operand.hbm [shape: bf16[3,128,128], index: 4, kind: input, shape index: {}]
  %s5 = inlined_call_operand.vmem [shape: f32[3,1,128], index: 5, kind: input, shape index: {}]
  %s6 = inlined_call_operand.vmem [shape: f32[3,1,128], index: 6, kind: input, shape index: {}]
  %s7 = inlined_call_operand.hbm [shape: f32[512,128], index: 7, kind: output, shape index: {0}]
  %s8 = inlined_call_operand.hbm [shape: f32[512,128], index: 8, kind: output, shape index: {1}]
  %s9 = inlined_call_operand.hbm [shape: f32[512,128], index: 9, kind: output, shape index: {2}]
  %10 = xla_tuple %s7, %s8, %s9
  %s11 = sld [smem:[#allocation0]]
  $region97: #{tpu_custom_call.1} parent=0
    _
  %s13 = ssub.s32 1, %s11
  %s14 = scalar_select 0, %s13, %s11
  $region1: #{tpu_custom_call.1} parent=0
    #allocation2 [shape = 'u8[65536]{0}', space=vmem, size = 0x10000, scoped, tag = 'input window, operand 0']
    #allocation3 [shape = 's32[2]{0}', space=sflag, size = 0x8, scoped, tag = 'scoped memory for tpu_custom_call.1']
    #allocation4 [shape = 's32[2]{0}', space=sflag, size = 0x8, scoped, tag = 'scoped memory for tpu_custom_call.1']
    #allocation5 [shape = 'u8[65536]{0}', space=vmem, size = 0x10000, scoped, tag = 'input window, operand 1']
    #allocation6 [shape = 's32[2]{0}', space=sflag, size = 0x8, scoped, tag = 'scoped memory for tpu_custom_call.1']
    #allocation7 [shape = 'u8[65536]{0}', space=vmem, size = 0x10000, scoped, tag = 'input window, operand 2']
    #allocation8 [shape = 'u8[196608]{0}', space=vmem, size = 0x30000, scoped, tag = 'input window, operand 3, single buffered']
    #allocation9 [shape = 's32[1]{0}', space=sflag, size = 0x4, scoped, tag = 'scoped memory for tpu_custom_call.1']
    #allocation10 [shape = 'u8[98304]{0}', space=vmem, size = 0x18000, scoped, tag = 'input window, operand 4, single buffered']
    #allocation11 [shape = 'u8[131072]{0}', space=vmem, size = 0x20000, scoped, tag = 'output window, operand 0']
    #allocation12 [shape = 'u8[131072]{0}', space=vmem, size = 0x20000, scoped, tag = 'output window, operand 1']
    #allocation13 [shape = 's32[2]{0}', space=sflag, size = 0x8, scoped, tag = 'scoped memory for tpu_custom_call.1']
    #allocation14 [shape = 'u8[131072]{0}', space=vmem, size = 0x20000, scoped, tag = 'output window, operand 2']
    %15 = vsyncpa [#allocation3], 0
    %s16 = scalar_lea.sflag [#allocation3], 1
    %17 = vsyncpa %s16, 0
    %18 = vsyncpa [#allocation6], 0
    %s19 = scalar_lea.sflag [#allocation6], 1
    %20 = vsyncpa %s19, 0
    %21 = vsyncpa [#allocation9], 0
    %22 = vsyncpa [#allocation4], 0
    %s23 = scalar_lea.sflag [#allocation4], 1
    %24 = vsyncpa %s23, 0
    %25 = vsyncpa [#allocation13], 0
    %s26 = scalar_lea.sflag [#allocation13], 1
    %27 = vsyncpa %s26, 0
    loop: start=0, step=1, limit=6
    $region2: #{tpu_custom_call.1} parent=1 // loop_pre_header
      _
    $region3: #{tpu_custom_call.1} parent=1 // loop_header
      %s29 = sphi 0, %s33
      %p30 = scmp.ge.s32.totalorder %s29, 6
      %s39 = sphi 0, %s41
      %s42 = sphi 0, %s39
      %s43 = sphi 0, %s42
      %s59 = sphi 0, %s43
      %s65 = sphi 0, %s67
      %s68 = sphi 0, %s65
      %s69 = sphi 0, %s68
      %s85 = sphi 0, %s69
      %s91 = sphi 0, %s93
      %s94 = sphi 0, %s91
      %s95 = sphi 0, %s94
      %s111 = sphi 0, %s95
      %s115 = sphi 0, %s115
      %s117 = sphi 0, %s115
      %s118 = sphi 0, %s117
      %s132 = sphi 0, %s118
      %s136 = sphi 0, %s136
      %s138 = sphi 0, %s136
      %s139 = sphi 0, %s138
      %s153 = sphi 0, %s139
      %s157 = sphi 0, %s157
      %s159 = sphi 0, %s157
      %s160 = sphi 0, %s159
      %s174 = sphi 0, %s160
      %s178 = sphi 0, %s178
      %s180 = sphi 0, %s178
      %s181 = sphi 0, %s180
      %s195 = sphi 0, %s181
      %s201 = sphi 0, %s203
      %s204 = sphi 0, %s201
      %s205 = sphi 0, %s204
      %s221 = sphi 0, %s205
      %s227 = sphi 0, %s229
      %s230 = sphi 0, %s227
      %s231 = sphi 0, %s230
      %s247 = sphi 0, %s231
      %s253 = sphi 0, %s255
      %s256 = sphi 0, %s253
      %s257 = sphi 0, %s256
      %s273 = sphi 0, %s257
    $region4: #{tpu_custom_call.1} parent=1 // loop_header_branch
      %32 = sbr.rel (%p30) target = $region8
    $region5: #{tpu_custom_call.1} parent=1 // loop_body
      %s34 = ssub.s32 %s29, 1
      %s35 = ssub.s32 %s29, 2
      %s36 = sadd.s32 %s29, 1
      %s37 = ssub.s32 %s29, %s36
      %p38 = scmp.eq.s32.totalorder %s37, 0
      %s40 = sadd.s32 %s39, 1
      %s41 = scalar_select %p38, %s39, %s40
      %p44 = pneg %p38
      %p45 = scmp.eq.s32.totalorder %s29, 3
      %p46 = por %p44, %p45
      %p47 = scmp.ne.s32.totalorder %s39, %s42
      %p48 = scmp.eq.s32.totalorder %s29, 0
      %p49 = por %p47, %p48
      %p50 = scmp.ne.s32.totalorder %s39, %s42
      %p51 = scmp.eq.s32.totalorder %s34, 3
      %p52 = por %p50, %p51
      %p53 = scmp.ne.s32.totalorder %s42, %s43
      %p54 = scmp.eq.s32.totalorder %s34, 0
      %p55 = por %p53, %p54
      %p56 = scmp.ne.s32.totalorder %s42, %s43
      %p57 = scmp.eq.s32.totalorder %s35, 3
      %p58 = por %p56, %p57
      %p60 = scmp.ne.s32.totalorder %s43, %s59
      %p61 = scmp.eq.s32.totalorder %s35, 0
      %p62 = por %p60, %p61
      %s63 = ssub.s32 %s29, %s36
      %p64 = scmp.eq.s32.totalorder %s63, 0
      %s66 = sadd.s32 %s65, 1
      %s67 = scalar_select %p64, %s65, %s66
      %p70 = pneg %p64
      %p71 = scmp.eq.s32.totalorder %s29, 3
      %p72 = por %p70, %p71
      %p73 = scmp.ne.s32.totalorder %s65, %s68
      %p74 = scmp.eq.s32.totalorder %s29, 0
      %p75 = por %p73, %p74
      %p76 = scmp.ne.s32.totalorder %s65, %s68
      %p77 = scmp.eq.s32.totalorder %s34, 3
      %p78 = por %p76, %p77
      %p79 = scmp.ne.s32.totalorder %s68, %s69
      %p80 = scmp.eq.s32.totalorder %s34, 0
      %p81 = por %p79, %p80
      %p82 = scmp.ne.s32.totalorder %s68, %s69
      %p83 = scmp.eq.s32.totalorder %s35, 3
      %p84 = por %p82, %p83
      %p86 = scmp.ne.s32.totalorder %s69, %s85
      %p87 = scmp.eq.s32.totalorder %s35, 0
      %p88 = por %p86, %p87
      %s89 = ssub.s32 %s29, %s36
      %p90 = scmp.eq.s32.totalorder %s89, 0
      %s92 = sadd.s32 %s91, 1
      %s93 = scalar_select %p90, %s91, %s92
      %p96 = pneg %p90
      %p97 = scmp.eq.s32.totalorder %s29, 3
      %p98 = por %p96, %p97
      %p99 = scmp.ne.s32.totalorder %s91, %s94
      %p100 = scmp.eq.s32.totalorder %s29, 0
      %p101 = por %p99, %p100
      %p102 = scmp.ne.s32.totalorder %s91, %s94
      %p103 = scmp.eq.s32.totalorder %s34, 3
      %p104 = por %p102, %p103
      %p105 = scmp.ne.s32.totalorder %s94, %s95
      %p106 = scmp.eq.s32.totalorder %s34, 0
      %p107 = por %p105, %p106
      %p108 = scmp.ne.s32.totalorder %s94, %s95
      %p109 = scmp.eq.s32.totalorder %s35, 3
      %p110 = por %p108, %p109
      %p112 = scmp.ne.s32.totalorder %s95, %s111
      %p113 = scmp.eq.s32.totalorder %s35, 0
      %p114 = por %p112, %p113
      %s116 = sadd.s32 %s115, 1
      %p119 = scmp.eq.s32.totalorder %s29, 3
      %p120 = scmp.ne.s32.totalorder %s115, %s117
      %p121 = scmp.eq.s32.totalorder %s29, 0
      %p122 = por %p120, %p121
      %p123 = scmp.ne.s32.totalorder %s115, %s117
      %p124 = scmp.eq.s32.totalorder %s34, 3
      %p125 = por %p123, %p124
      %p126 = scmp.ne.s32.totalorder %s117, %s118
      %p127 = scmp.eq.s32.totalorder %s34, 0
      %p128 = por %p126, %p127
      %p129 = scmp.ne.s32.totalorder %s117, %s118
      %p130 = scmp.eq.s32.totalorder %s35, 3
      %p131 = por %p129, %p130
      %p133 = scmp.ne.s32.totalorder %s118, %s132
      %p134 = scmp.eq.s32.totalorder %s35, 0
      %p135 = por %p133, %p134
      %s137 = sadd.s32 %s136, 1
      %p140 = scmp.eq.s32.totalorder %s29, 3
      %p141 = scmp.ne.s32.totalorder %s136, %s138
      %p142 = scmp.eq.s32.totalorder %s29, 0
      %p143 = por %p141, %p142
      %p144 = scmp.ne.s32.totalorder %s136, %s138
      %p145 = scmp.eq.s32.totalorder %s34, 3
      %p146 = por %p144, %p145
      %p147 = scmp.ne.s32.totalorder %s138, %s139
      %p148 = scmp.eq.s32.totalorder %s34, 0
      %p149 = por %p147, %p148
      %p150 = scmp.ne.s32.totalorder %s138, %s139
      %p151 = scmp.eq.s32.totalorder %s35, 3
      %p152 = por %p150, %p151
      %p154 = scmp.ne.s32.totalorder %s139, %s153
      %p155 = scmp.eq.s32.totalorder %s35, 0
      %p156 = por %p154, %p155
      %s158 = sadd.s32 %s157, 1
      %p161 = scmp.eq.s32.totalorder %s29, 3
      %p162 = scmp.ne.s32.totalorder %s157, %s159
      %p163 = scmp.eq.s32.totalorder %s29, 0
      %p164 = por %p162, %p163
      %p165 = scmp.ne.s32.totalorder %s157, %s159
      %p166 = scmp.eq.s32.totalorder %s34, 3
      %p167 = por %p165, %p166
      %p168 = scmp.ne.s32.totalorder %s159, %s160
      %p169 = scmp.eq.s32.totalorder %s34, 0
      %p170 = por %p168, %p169
      %p171 = scmp.ne.s32.totalorder %s159, %s160
      %p172 = scmp.eq.s32.totalorder %s35, 3
      %p173 = por %p171, %p172
      %p175 = scmp.ne.s32.totalorder %s160, %s174
      %p176 = scmp.eq.s32.totalorder %s35, 0
      %p177 = por %p175, %p176
      %s179 = sadd.s32 %s178, 1
      %p182 = scmp.eq.s32.totalorder %s29, 3
      %p183 = scmp.ne.s32.totalorder %s178, %s180
      %p184 = scmp.eq.s32.totalorder %s29, 0
      %p185 = por %p183, %p184
      %p186 = scmp.ne.s32.totalorder %s178, %s180
      %p187 = scmp.eq.s32.totalorder %s34, 3
      %p188 = por %p186, %p187
      %p189 = scmp.ne.s32.totalorder %s180, %s181
      %p190 = scmp.eq.s32.totalorder %s34, 0
      %p191 = por %p189, %p190
      %p192 = scmp.ne.s32.totalorder %s180, %s181
      %p193 = scmp.eq.s32.totalorder %s35, 3
      %p194 = por %p192, %p193
      %p196 = scmp.ne.s32.totalorder %s181, %s195
      %p197 = scmp.eq.s32.totalorder %s35, 0
      %p198 = por %p196, %p197
      %s199 = ssub.s32 %s29, %s36
      %p200 = scmp.eq.s32.totalorder %s199, 0
      %s202 = sadd.s32 %s201, 1
      %s203 = scalar_select %p200, %s201, %s202
      %p206 = pneg %p200
      %p207 = scmp.eq.s32.totalorder %s29, 3
      %p208 = por %p206, %p207
      %p209 = scmp.ne.s32.totalorder %s201, %s204
      %p210 = scmp.eq.s32.totalorder %s29, 0
      %p211 = por %p209, %p210
      %p212 = scmp.ne.s32.totalorder %s201, %s204
      %p213 = scmp.eq.s32.totalorder %s34, 3
      %p214 = por %p212, %p213
      %p215 = scmp.ne.s32.totalorder %s204, %s205
      %p216 = scmp.eq.s32.totalorder %s34, 0
      %p217 = por %p215, %p216
      %p218 = scmp.ne.s32.totalorder %s204, %s205
      %p219 = scmp.eq.s32.totalorder %s35, 3
      %p220 = por %p218, %p219
      %p222 = scmp.ne.s32.totalorder %s205, %s221
      %p223 = scmp.eq.s32.totalorder %s35, 0
      %p224 = por %p222, %p223
      %s225 = ssub.s32 %s29, %s36
      %p226 = scmp.eq.s32.totalorder %s225, 0
      %s228 = sadd.s32 %s227, 1
      %s229 = scalar_select %p226, %s227, %s228
      %p232 = pneg %p226
      %p233 = scmp.eq.s32.totalorder %s29, 3
      %p234 = por %p232, %p233
      %p235 = scmp.ne.s32.totalorder %s227, %s230
      %p236 = scmp.eq.s32.totalorder %s29, 0
      %p237 = por %p235, %p236
      %p238 = scmp.ne.s32.totalorder %s227, %s230
      %p239 = scmp.eq.s32.totalorder %s34, 3
      %p240 = por %p238, %p239
      %p241 = scmp.ne.s32.totalorder %s230, %s231
      %p242 = scmp.eq.s32.totalorder %s34, 0
      %p243 = por %p241, %p242
      %p244 = scmp.ne.s32.totalorder %s230, %s231
      %p245 = scmp.eq.s32.totalorder %s35, 3
      %p246 = por %p244, %p245
      %p248 = scmp.ne.s32.totalorder %s231, %s247
      %p249 = scmp.eq.s32.totalorder %s35, 0
      %p250 = por %p248, %p249
      %s251 = ssub.s32 %s29, %s36
      %p252 = scmp.eq.s32.totalorder %s251, 0
      %s254 = sadd.s32 %s253, 1
      %s255 = scalar_select %p252, %s253, %s254
      %p258 = pneg %p252
      %p259 = scmp.eq.s32.totalorder %s29, 3
      %p260 = por %p258, %p259
      %p261 = scmp.ne.s32.totalorder %s253, %s256
      %p262 = scmp.eq.s32.totalorder %s29, 0
      %p263 = por %p261, %p262
      %p264 = scmp.ne.s32.totalorder %s253, %s256
      %p265 = scmp.eq.s32.totalorder %s34, 3
      %p266 = por %p264, %p265
      %p267 = scmp.ne.s32.totalorder %s256, %s257
      %p268 = scmp.eq.s32.totalorder %s34, 0
      %p269 = por %p267, %p268
      %p270 = scmp.ne.s32.totalorder %s256, %s257
      %p271 = scmp.eq.s32.totalorder %s35, 3
      %p272 = por %p270, %p271
      %p274 = scmp.ne.s32.totalorder %s257, %s273
      %p275 = scmp.eq.s32.totalorder %s35, 0
      %p276 = por %p274, %p275
      %p277 = scmp.le.s32.totalorder 1, %s29
      %p278 = scmp.lt.s32.totalorder %s29, 5
      %p279 = pnand %p277, %p278
      %p280 = pneg %p279
      // Predicated region
      $region9: #{tpu_custom_call.1} parent=5 // pred_check
        _
      $region10: #{tpu_custom_call.1} parent=5 // pred_check_branch
        %282 = sbr.rel (%p279) target = $region12
      $region11: #{tpu_custom_call.1} parent=5 // pred_region
        %s283 = ssub.s32 %s29, 1
        // Predicated region
        $region13: #{tpu_custom_call.1} parent=11 // pred_check
          %p284 = pneg %p128
        $region14: #{tpu_custom_call.1} parent=11 // pred_check_branch
          %286 = sbr.rel (%p284) target = $region16
        $region15: #{tpu_custom_call.1} parent=11 // pred_region
          %s288 = ssub.s32 6144, 6144
          %289 = vsyncadd [#allocation9], %s288
          %s290 = sshll.u32 [#allocation8], 4
          %s291 = int_to_ptr.vmem [resolvable:$true] %s290
          %296 = dma.hbm_to_vmem [thread:$0]  %s3, 6144, %s291, [#allocation9], 128, 128, 8
        $region16: #{tpu_custom_call.1} parent=11 // pred_fallthru
          _
        // Predicated region
        $region17: #{tpu_custom_call.1} parent=11 // pred_check
          %p297 = pneg %p149
        $region18: #{tpu_custom_call.1} parent=11 // pred_check_branch
          %299 = sbr.rel (%p297) target = $region20
        $region19: #{tpu_custom_call.1} parent=11 // pred_region
          %s301 = ssub.s32 3072, 3072
          %302 = vsyncadd [#allocation9], %s301
          %s303 = sshll.u32 [#allocation10], 4
          %s304 = int_to_ptr.vmem [resolvable:$true] %s303
          %309 = dma.hbm_to_vmem [thread:$0]  %s4, 3072, %s304, [#allocation9], 64, 64, 4
        $region20: #{tpu_custom_call.1} parent=11 // pred_fallthru
          _
        // Predicated region
        $region21: #{tpu_custom_call.1} parent=11 // pred_check
          %p310 = pneg %p170
        $region22: #{tpu_custom_call.1} parent=11 // pred_check_branch
          %312 = sbr.rel (%p310) target = $region24
        $region23: #{tpu_custom_call.1} parent=11 // pred_region
          _
        $region24: #{tpu_custom_call.1} parent=11 // pred_fallthru
          _
        // Predicated region
        $region25: #{tpu_custom_call.1} parent=11 // pred_check
          %p313 = pneg %p191
        $region26: #{tpu_custom_call.1} parent=11 // pred_check_branch
          %315 = sbr.rel (%p313) target = $region28
        $region27: #{tpu_custom_call.1} parent=11 // pred_region
          _
        $region28: #{tpu_custom_call.1} parent=11 // pred_fallthru
          _
      $region12: #{tpu_custom_call.1} parent=5 // pred_fallthru
        _
      %p316 = scmp.lt.s32.totalorder %s29, 4
      // Predicated region
      $region29: #{tpu_custom_call.1} parent=5 // pred_check
        %p317 = pneg %p316
      $region30: #{tpu_custom_call.1} parent=5 // pred_check_branch
        %319 = sbr.rel (%p317) target = $region32
      $region31: #{tpu_custom_call.1} parent=5 // pred_region
        // Predicated region
        $region33: #{tpu_custom_call.1} parent=31 // pred_check
          %p320 = pneg %p49
        $region34: #{tpu_custom_call.1} parent=31 // pred_check_branch
          %322 = sbr.rel (%p320) target = $region36
        $region35: #{tpu_custom_call.1} parent=31 // pred_region
          %s323 = sand.u32 %s39, 1
          %s324 = scalar_lea.sflag [#allocation3], %s323
          %s325 = sand.u32 %s39, 1
          %s326 = smul.addr %s325, 64
          %s327 = scalar_lea.vmem [#allocation2], %s326
          %s328 = smul.u32 16, %s29
          %s330 = ssub.s32 1024, 1024
          %331 = vsyncadd %s324, %s330
          %s332 = smul.addr %s328, 64
          %s333 = scalar_lea.hbm %s0, %s332
          %s334 = sshll.u32 %s327, 4
          %s335 = int_to_ptr.vmem [resolvable:$true] %s334
          %340 = dma.hbm_to_vmem [thread:$0]  %s333, 1024, %s335, %s324, 64, 64, 4
        $region36: #{tpu_custom_call.1} parent=31 // pred_fallthru
          _
        // Predicated region
        $region37: #{tpu_custom_call.1} parent=31 // pred_check
          %p341 = pneg %p75
        $region38: #{tpu_custom_call.1} parent=31 // pred_check_branch
          %343 = sbr.rel (%p341) target = $region40
        $region39: #{tpu_custom_call.1} parent=31 // pred_region
          %s344 = sand.u32 %s29, 1
          %s345 = scalar_lea.sflag [#allocation6], %s344
          %s346 = sand.u32 %s65, 1
          %s347 = smul.addr %s346, 64
          %s348 = scalar_lea.vmem [#allocation5], %s347
          %s349 = smul.u32 16, %s29
          %s351 = ssub.s32 1024, 1024
          %352 = vsyncadd %s345, %s351
          %s353 = smul.addr %s349, 64
          %s354 = scalar_lea.hbm %s1, %s353
          %s355 = sshll.u32 %s348, 4
          %s356 = int_to_ptr.vmem [resolvable:$true] %s355
          %361 = dma.hbm_to_vmem [thread:$0]  %s354, 1024, %s356, %s345, 64, 64, 4
        $region40: #{tpu_custom_call.1} parent=31 // pred_fallthru
          _
        // Predicated region
        $region41: #{tpu_custom_call.1} parent=31 // pred_check
          %p362 = pneg %p101
        $region42: #{tpu_custom_call.1} parent=31 // pred_check_branch
          %364 = sbr.rel (%p362) target = $region44
        $region43: #{tpu_custom_call.1} parent=31 // pred_region
          %s365 = sand.u32 %s29, 1
          %s366 = scalar_lea.sflag [#allocation6], %s365
          %s367 = sand.u32 %s91, 1
          %s368 = smul.addr %s367, 64
          %s369 = scalar_lea.vmem [#allocation7], %s368
          %s370 = smul.u32 16, %s29
          %s372 = ssub.s32 1024, 1024
          %373 = vsyncadd %s366, %s372
          %s374 = smul.addr %s370, 64
          %s375 = scalar_lea.hbm %s2, %s374
          %s376 = sshll.u32 %s369, 4
          %s377 = int_to_ptr.vmem [resolvable:$true] %s376
          %382 = dma.hbm_to_vmem [thread:$0]  %s375, 1024, %s377, %s366, 64, 64, 4
        $region44: #{tpu_custom_call.1} parent=31 // pred_fallthru
          _
      $region32: #{tpu_custom_call.1} parent=5 // pred_fallthru
        _
      %p383 = scmp.le.s32.totalorder 1, %s29
      %p384 = scmp.lt.s32.totalorder %s29, 5
      %p385 = pnand %p383, %p384
      %p386 = pneg %p385
      // Predicated region
      $region45: #{tpu_custom_call.1} parent=5 // pred_check
        _
      $region46: #{tpu_custom_call.1} parent=5 // pred_check_branch
        %388 = sbr.rel (%p385) target = $region48
      $region47: #{tpu_custom_call.1} parent=5 // pred_region
        %s389 = ssub.s32 %s29, 1
        %s390 = sand.u32 %s42, 1
        %s391 = scalar_lea.sflag [#allocation3], %s390
        %s392 = sand.u32 %s42, 1
        %s393 = smul.addr %s392, 64
        %s394 = scalar_lea.vmem [#allocation2], %s393
        // Predicated region
        $region49: #{tpu_custom_call.1} parent=47 // pred_check
          %p395 = pneg %p55
        $region50: #{tpu_custom_call.1} parent=47 // pred_check_branch
          %397 = sbr.rel (%p395) target = $region52
        $region51: #{tpu_custom_call.1} parent=47 // pred_region
          %398 = dma.done %s391, 1024
        $region52: #{tpu_custom_call.1} parent=47 // pred_fallthru
          _
        %s399 = sand.u32 %s34, 1
        %s400 = scalar_lea.sflag [#allocation6], %s399
        %s401 = sand.u32 %s68, 1
        %s402 = smul.addr %s401, 64
        %s403 = scalar_lea.vmem [#allocation5], %s402
        // Predicated region
        $region53: #{tpu_custom_call.1} parent=47 // pred_check
          %p404 = pneg %p81
        $region54: #{tpu_custom_call.1} parent=47 // pred_check_branch
          %406 = sbr.rel (%p404) target = $region56
        $region55: #{tpu_custom_call.1} parent=47 // pred_region
          %407 = dma.done %s400, 1024
        $region56: #{tpu_custom_call.1} parent=47 // pred_fallthru
          _
        %s408 = sand.u32 %s34, 1
        %s409 = scalar_lea.sflag [#allocation6], %s408
        %s410 = sand.u32 %s94, 1
        %s411 = smul.addr %s410, 64
        %s412 = scalar_lea.vmem [#allocation7], %s411
        // Predicated region
        $region57: #{tpu_custom_call.1} parent=47 // pred_check
          %p413 = pneg %p107
        $region58: #{tpu_custom_call.1} parent=47 // pred_check_branch
          %415 = sbr.rel (%p413) target = $region60
        $region59: #{tpu_custom_call.1} parent=47 // pred_region
          %416 = dma.done %s409, 1024
        $region60: #{tpu_custom_call.1} parent=47 // pred_fallthru
          _
        // Predicated region
        $region61: #{tpu_custom_call.1} parent=47 // pred_check
          %p417 = pneg %p128
        $region62: #{tpu_custom_call.1} parent=47 // pred_check_branch
          %419 = sbr.rel (%p417) target = $region64
        $region63: #{tpu_custom_call.1} parent=47 // pred_region
          %420 = dma.done [#allocation9], 6144
        $region64: #{tpu_custom_call.1} parent=47 // pred_fallthru
          _
        // Predicated region
        $region65: #{tpu_custom_call.1} parent=47 // pred_check
          %p421 = pneg %p149
        $region66: #{tpu_custom_call.1} parent=47 // pred_check_branch
          %423 = sbr.rel (%p421) target = $region68
        $region67: #{tpu_custom_call.1} parent=47 // pred_region
          %424 = dma.done [#allocation9], 3072
        $region68: #{tpu_custom_call.1} parent=47 // pred_fallthru
          _
        %s425 = sand.u32 %s42, 1
        %s426 = scalar_lea.sflag [#allocation3], %s425
        %s427 = sand.u32 %s42, 1
        %s428 = smul.addr %s427, 64
        %s429 = scalar_lea.vmem [#allocation2], %s428
        %p430 = pneg %p55
        %p431 = pneg %p52
        %s432 = sand.u32 %s34, 1
        %s433 = scalar_lea.sflag [#allocation6], %s432
        %s434 = sand.u32 %s68, 1
        %s435 = smul.addr %s434, 64
        %s436 = scalar_lea.vmem [#allocation5], %s435
        %p437 = pneg %p81
        %p438 = pneg %p78
        %s439 = sand.u32 %s34, 1
        %s440 = scalar_lea.sflag [#allocation6], %s439
        %s441 = sand.u32 %s94, 1
        %s442 = smul.addr %s441, 64
        %s443 = scalar_lea.vmem [#allocation7], %s442
        %p444 = pneg %p107
        %p445 = pneg %p104
        %p446 = pneg %p128
        %p447 = pneg %p125
        %p448 = pneg %p149
        %p449 = pneg %p146
        %p450 = pneg %p170
        %p451 = pneg %p167
        %p452 = pneg %p191
        %p453 = pneg %p188
        %p454 = pneg %p217
        %p455 = pneg %p214
        %s456 = sand.u32 %s204, 1
        %s457 = scalar_lea.sflag [#allocation4], %s456
        %s458 = sand.u32 %s204, 1
        %s459 = smul.addr %s458, 128
        %s460 = scalar_lea.vmem [#allocation11], %s459
        %p461 = pneg %p243
        %p462 = pneg %p240
        %s463 = sand.u32 %s34, 1
        %s464 = scalar_lea.sflag [#allocation13], %s463
        %s465 = sand.u32 %s230, 1
        %s466 = smul.addr %s465, 128
        %s467 = scalar_lea.vmem [#allocation12], %s466
        %p468 = pneg %p269
        %p469 = pneg %p266
        %s470 = sand.u32 %s34, 1
        %s471 = scalar_lea.sflag [#allocation13], %s470
        %s472 = sand.u32 %s256, 1
        %s473 = smul.addr %s472, 128
        %s474 = scalar_lea.vmem [#allocation14], %s473
        %s475 = smul.u32 16, %s34
        %s476 = smul.u32 16, %s34
        %s477 = smul.u32 16, %s34
        %s478 = smul.u32 16, %s34
        %s479 = smul.u32 16, %s34
        %s480 = smul.u32 16, %s34
        %v482 = vld [vmem:[%s394] sm:$0xf]
        %v483 = vld [vmem:[%s394 + $0x4] sm:$0xf]
        %v484 = vld [vmem:[%s394 + $0x8] sm:$0xf]
        %v485 = vld [vmem:[%s394 + $0xc] sm:$0xf]
        %v486 = vld [vmem:[%s394 + $0x10] sm:$0xf]
        %v487 = vld [vmem:[%s394 + $0x14] sm:$0xf]
        %v488 = vld [vmem:[%s394 + $0x18] sm:$0xf]
        %v489 = vld [vmem:[%s394 + $0x1c] sm:$0xf]
        %v490 = vld [vmem:[%s394 + $0x20] sm:$0xf]
        %v491 = vld [vmem:[%s394 + $0x24] sm:$0xf]
        %v492 = vld [vmem:[%s394 + $0x28] sm:$0xf]
        %v493 = vld [vmem:[%s394 + $0x2c] sm:$0xf]
        %v494 = vld [vmem:[%s394 + $0x30] sm:$0xf]
        %v495 = vld [vmem:[%s394 + $0x34] sm:$0xf]
        %v496 = vld [vmem:[%s394 + $0x38] sm:$0xf]
        %v497 = vld [vmem:[%s394 + $0x3c] sm:$0xf]
        %v498 = vld [vmem:[#allocation8] sm:$0xff]
        %v499 = vld [vmem:[#allocation8 + $0x8] sm:$0xff]
        %v500 = vld [vmem:[#allocation8 + $0x10] sm:$0xff]
        %v501 = vld [vmem:[#allocation8 + $0x18] sm:$0xff]
        %v502 = vld [vmem:[#allocation8 + $0x20] sm:$0xff]
        %v503 = vld [vmem:[#allocation8 + $0x28] sm:$0xff]
        %v504 = vld [vmem:[#allocation8 + $0x30] sm:$0xff]
        %v505 = vld [vmem:[#allocation8 + $0x38] sm:$0xff]
        %v506 = vld [vmem:[#allocation8 + $0x40] sm:$0xff]
        %v507 = vld [vmem:[#allocation8 + $0x48] sm:$0xff]
        %v508 = vld [vmem:[#allocation8 + $0x50] sm:$0xff]
        %v509 = vld [vmem:[#allocation8 + $0x58] sm:$0xff]
        %v510 = vld [vmem:[#allocation8 + $0x60] sm:$0xff]
        %v511 = vld [vmem:[#allocation8 + $0x68] sm:$0xff]
        %v512 = vld [vmem:[#allocation8 + $0x70] sm:$0xff]
        %v513 = vld [vmem:[#allocation8 + $0x78] sm:$0xff]
        %v530 = vunpack.c.l.b16 %v482
        %v531 = vunpack.c.l.b16 %v483
        %v532 = vunpack.c.l.b16 %v484
        %v533 = vunpack.c.l.b16 %v485
        %v534 = vunpack.c.l.b16 %v486
        %v535 = vunpack.c.l.b16 %v487
        %v536 = vunpack.c.l.b16 %v488
        %v537 = vunpack.c.l.b16 %v489
        %v538 = vunpack.c.l.b16 %v490
        %v539 = vunpack.c.l.b16 %v491
        %v540 = vunpack.c.l.b16 %v492
        %v541 = vunpack.c.l.b16 %v493
        %v542 = vunpack.c.l.b16 %v494
        %v543 = vunpack.c.l.b16 %v495
        %v544 = vunpack.c.l.b16 %v496
        %v545 = vunpack.c.l.b16 %v497
        %v546 = vpack.c.b16 %v531, %v530
        %v547 = vpack.c.b16 %v533, %v532
        %v548 = vpack.c.b16 %v535, %v534
        %v549 = vpack.c.b16 %v537, %v536
        %v550 = vpack.c.b16 %v539, %v538
        %v551 = vpack.c.b16 %v541, %v540
        %v552 = vpack.c.b16 %v543, %v542
        %v553 = vpack.c.b16 %v545, %v544
        %v578 = vunpack.c.l.b16 %v498
        %v579 = vunpack.c.h.b16 %v498
        %v580 = vunpack.c.l.b16 %v499
        %v581 = vunpack.c.h.b16 %v499
        %v582 = vunpack.c.l.b16 %v500
        %v583 = vunpack.c.h.b16 %v500
        %v584 = vunpack.c.l.b16 %v501
        %v585 = vunpack.c.h.b16 %v501
        %v586 = vunpack.c.l.b16 %v502
        %v587 = vunpack.c.h.b16 %v502
        %v588 = vunpack.c.l.b16 %v503
        %v589 = vunpack.c.h.b16 %v503
        %v590 = vunpack.c.l.b16 %v504
        %v591 = vunpack.c.h.b16 %v504
        %v592 = vunpack.c.l.b16 %v505
        %v593 = vunpack.c.h.b16 %v505
        %v594 = vunpack.c.l.b16 %v506
        %v595 = vunpack.c.h.b16 %v506
        %v596 = vunpack.c.l.b16 %v507
        %v597 = vunpack.c.h.b16 %v507
        %v598 = vunpack.c.l.b16 %v508
        %v599 = vunpack.c.h.b16 %v508
        %v600 = vunpack.c.l.b16 %v509
        %v601 = vunpack.c.h.b16 %v509
        %v602 = vunpack.c.l.b16 %v510
        %v603 = vunpack.c.h.b16 %v510
        %v604 = vunpack.c.l.b16 %v511
        %v605 = vunpack.c.h.b16 %v511
        %v606 = vunpack.c.l.b16 %v512
        %v607 = vunpack.c.h.b16 %v512
        %v608 = vunpack.c.l.b16 %v513
        %v609 = vunpack.c.h.b16 %v513
        %v610 = vpack.c.b16 %v580, %v578
        %v611 = vpack.c.b16 %v581, %v579
        %v612 = vpack.c.b16 %v584, %v582
        %v613 = vpack.c.b16 %v585, %v583
        %v614 = vpack.c.b16 %v588, %v586
        %v615 = vpack.c.b16 %v589, %v587
        %v616 = vpack.c.b16 %v592, %v590
        %v617 = vpack.c.b16 %v593, %v591
        %v618 = vpack.c.b16 %v596, %v594
        %v619 = vpack.c.b16 %v597, %v595
        %v620 = vpack.c.b16 %v600, %v598
        %v621 = vpack.c.b16 %v601, %v599
        %v622 = vpack.c.b16 %v604, %v602
        %v623 = vpack.c.b16 %v605, %v603
        %v624 = vpack.c.b16 %v608, %v606
        %v625 = vpack.c.b16 %v609, %v607
        %642 = vmatprep.subr.bf16.mxu0 %v611
        %643 = vmatpush1.bf16.msra.mxu0 %v610
        %644 = vmatprep.subr.bf16.mxu0 %v613
        %645 = vmatpush1.bf16.msra.mxu0 %v612
        %646 = vmatprep.subr.bf16.mxu0 %v615
        %647 = vmatpush1.bf16.msra.mxu0 %v614
        %648 = vmatprep.subr.bf16.mxu0 %v617
        %649 = vmatpush1.bf16.msra.mxu0 %v616
        %650 = vmatprep.subr.bf16.mxu0 %v619
        %651 = vmatpush1.bf16.msra.mxu0 %v618
        %652 = vmatprep.subr.bf16.mxu0 %v621
        %653 = vmatpush1.bf16.msra.mxu0 %v620
        %654 = vmatprep.subr.bf16.mxu0 %v623
        %655 = vmatpush1.bf16.msra.mxu0 %v622
        %656 = vmatprep.subr.bf16.mxu0 %v625
        %657 = vmatpush1.bf16.msra.mxu0 %v624
        %658 = vmatprep.subr.bf16.mxu0 0
        %659 = vmatpush1.bf16.msra.mxu0 0
        %660 = vmatprep.subr.bf16.mxu0 0
        %661 = vmatpush1.bf16.msra.mxu0 0
        %662 = vmatprep.subr.bf16.mxu0 0
        %663 = vmatpush1.bf16.msra.mxu0 0
        %664 = vmatprep.subr.bf16.mxu0 0
        %665 = vmatpush1.bf16.msra.mxu0 0
        %666 = vmatprep.subr.bf16.mxu0 0
        %667 = vmatpush1.bf16.msra.mxu0 0
        %668 = vmatprep.subr.bf16.mxu0 0
        %669 = vmatpush1.bf16.msra.mxu0 0
        %670 = vmatprep.subr.bf16.mxu0 0
        %671 = vmatpush1.bf16.msra.mxu0 0
        %672 = vmatprep.subr.bf16.mxu0 0
        %673 = vmatpush1.bf16.msra.mxu0 0
        %674 = vmatprep.mubr.bf16.mxu0 0
        %675 = vmatmul.mubr.bf16.gmra.mrb[0].mxu0 %v546
        %v676 = vpop.f32.mrb[0].mxu0
        %v677 = vadd.f32 0.0, %v676
        %v678 = vpop.f32.mrb[0].mxu0
        %v679 = vadd.f32 0.0, %v678
        %v680 = vpop.f32.mrb[0].mxu0
        %v681 = vadd.f32 0.0, %v680
        %v682 = vpop.f32.mrb[0].mxu0
        %v683 = vadd.f32 0.0, %v682
        %684 = vmatprep.mubr.bf16.mxu0 0
        %685 = vmatmul.mubr.bf16.gmra.mrb[0].mxu0 %v547
        %v686 = vpop.f32.mrb[0].mxu0
        %v687 = vadd.f32 0.0, %v686
        %v688 = vpop.f32.mrb[0].mxu0
        %v689 = vadd.f32 0.0, %v688
        %v690 = vpop.f32.mrb[0].mxu0
        %v691 = vadd.f32 0.0, %v690
        %v692 = vpop.f32.mrb[0].mxu0
        %v693 = vadd.f32 0.0, %v692
        %694 = vmatprep.mubr.bf16.mxu0 0
        %695 = vmatmul.mubr.bf16.gmra.mrb[0].mxu0 %v548
        %v696 = vpop.f32.mrb[0].mxu0
        %v697 = vadd.f32 0.0, %v696
        %v698 = vpop.f32.mrb[0].mxu0
        %v699 = vadd.f32 0.0, %v698
        %v700 = vpop.f32.mrb[0].mxu0
        %v701 = vadd.f32 0.0, %v700
        %v702 = vpop.f32.mrb[0].mxu0
        %v703 = vadd.f32 0.0, %v702
        %704 = vmatprep.mubr.bf16.mxu0 0
        %705 = vmatmul.mubr.bf16.gmra.mrb[0].mxu0 %v549
        %v706 = vpop.f32.mrb[0].mxu0
        %v707 = vadd.f32 0.0, %v706
        %v708 = vpop.f32.mrb[0].mxu0
        %v709 = vadd.f32 0.0, %v708
        %v710 = vpop.f32.mrb[0].mxu0
        %v711 = vadd.f32 0.0, %v710
        %v712 = vpop.f32.mrb[0].mxu0
        %v713 = vadd.f32 0.0, %v712
        %714 = vmatprep.mubr.bf16.mxu0 0
        %715 = vmatmul.mubr.bf16.gmra.mrb[0].mxu0 %v550
        %v716 = vpop.f32.mrb[0].mxu0
        %v717 = vadd.f32 0.0, %v716
        %v718 = vpop.f32.mrb[0].mxu0
        %v719 = vadd.f32 0.0, %v718
        %v720 = vpop.f32.mrb[0].mxu0
        %v721 = vadd.f32 0.0, %v720
        %v722 = vpop.f32.mrb[0].mxu0
        %v723 = vadd.f32 0.0, %v722
        %724 = vmatprep.mubr.bf16.mxu0 0
        %725 = vmatmul.mubr.bf16.gmra.mrb[0].mxu0 %v551
        %v726 = vpop.f32.mrb[0].mxu0
        %v727 = vadd.f32 0.0, %v726
        %v728 = vpop.f32.mrb[0].mxu0
        %v729 = vadd.f32 0.0, %v728
        %v730 = vpop.f32.mrb[0].mxu0
        %v731 = vadd.f32 0.0, %v730
        %v732 = vpop.f32.mrb[0].mxu0
        %v733 = vadd.f32 0.0, %v732
        %734 = vmatprep.mubr.bf16.mxu0 0
        %735 = vmatmul.mubr.bf16.gmra.mrb[0].mxu0 %v552
        %v736 = vpop.f32.mrb[0].mxu0
        %v737 = vadd.f32 0.0, %v736
        %v738 = vpop.f32.mrb[0].mxu0
        %v739 = vadd.f32 0.0, %v738
        %v740 = vpop.f32.mrb[0].mxu0
        %v741 = vadd.f32 0.0, %v740
        %v742 = vpop.f32.mrb[0].mxu0
        %v743 = vadd.f32 0.0, %v742
        %744 = vmatprep.mubr.bf16.mxu0 0
        %745 = vmatmul.mubr.bf16.gmra.mrb[0].mxu0 %v553
        %v746 = vpop.f32.mrb[0].mxu0
        %v747 = vadd.f32 0.0, %v746
        %v748 = vpop.f32.mrb[0].mxu0
        %v749 = vadd.f32 0.0, %v748
        %v750 = vpop.f32.mrb[0].mxu0
        %v751 = vadd.f32 0.0, %v750
        %v752 = vpop.f32.mrb[0].mxu0
        %v753 = vadd.f32 0.0, %v752
        %754 = vdwg.mxu0
        %v755 = vld [vmem:[%s403] sm:$0xf]
        %v756 = vld [vmem:[%s403 + $0x4] sm:$0xf]
        %v757 = vld [vmem:[%s403 + $0x8] sm:$0xf]
        %v758 = vld [vmem:[%s403 + $0xc] sm:$0xf]
        %v759 = vld [vmem:[%s403 + $0x10] sm:$0xf]
        %v760 = vld [vmem:[%s403 + $0x14] sm:$0xf]
        %v761 = vld [vmem:[%s403 + $0x18] sm:$0xf]
        %v762 = vld [vmem:[%s403 + $0x1c] sm:$0xf]
        %v763 = vld [vmem:[%s403 + $0x20] sm:$0xf]
        %v764 = vld [vmem:[%s403 + $0x24] sm:$0xf]
        %v765 = vld [vmem:[%s403 + $0x28] sm:$0xf]
        %v766 = vld [vmem:[%s403 + $0x2c] sm:$0xf]
        %v767 = vld [vmem:[%s403 + $0x30] sm:$0xf]
        %v768 = vld [vmem:[%s403 + $0x34] sm:$0xf]
        %v769 = vld [vmem:[%s403 + $0x38] sm:$0xf]
        %v770 = vld [vmem:[%s403 + $0x3c] sm:$0xf]
        %s771 = scalar_lea.vmem [#allocation8], 128
        %v772 = vld [vmem:[%s771] sm:$0xff]
        %v773 = vld [vmem:[%s771 + $0x8] sm:$0xff]
        %v774 = vld [vmem:[%s771 + $0x10] sm:$0xff]
        %v775 = vld [vmem:[%s771 + $0x18] sm:$0xff]
        %v776 = vld [vmem:[%s771 + $0x20] sm:$0xff]
        %v777 = vld [vmem:[%s771 + $0x28] sm:$0xff]
        %v778 = vld [vmem:[%s771 + $0x30] sm:$0xff]
        %v779 = vld [vmem:[%s771 + $0x38] sm:$0xff]
        %v780 = vld [vmem:[%s771 + $0x40] sm:$0xff]
        %v781 = vld [vmem:[%s771 + $0x48] sm:$0xff]
        %v782 = vld [vmem:[%s771 + $0x50] sm:$0xff]
        %v783 = vld [vmem:[%s771 + $0x58] sm:$0xff]
        %v784 = vld [vmem:[%s771 + $0x60] sm:$0xff]
        %v785 = vld [vmem:[%s771 + $0x68] sm:$0xff]
        %v786 = vld [vmem:[%s771 + $0x70] sm:$0xff]
        %v787 = vld [vmem:[%s771 + $0x78] sm:$0xff]
        %v804 = vunpack.c.l.b16 %v755
        %v805 = vunpack.c.l.b16 %v756
        %v806 = vunpack.c.l.b16 %v757
        %v807 = vunpack.c.l.b16 %v758
        %v808 = vunpack.c.l.b16 %v759
        %v809 = vunpack.c.l.b16 %v760
        %v810 = vunpack.c.l.b16 %v761
        %v811 = vunpack.c.l.b16 %v762
        %v812 = vunpack.c.l.b16 %v763
        %v813 = vunpack.c.l.b16 %v764
        %v814 = vunpack.c.l.b16 %v765
        %v815 = vunpack.c.l.b16 %v766
        %v816 = vunpack.c.l.b16 %v767
        %v817 = vunpack.c.l.b16 %v768
        %v818 = vunpack.c.l.b16 %v769
        %v819 = vunpack.c.l.b16 %v770
        %v820 = vpack.c.b16 %v805, %v804
        %v821 = vpack.c.b16 %v807, %v806
        %v822 = vpack.c.b16 %v809, %v808
        %v823 = vpack.c.b16 %v811, %v810
        %v824 = vpack.c.b16 %v813, %v812
        %v825 = vpack.c.b16 %v815, %v814
        %v826 = vpack.c.b16 %v817, %v816
        %v827 = vpack.c.b16 %v819, %v818
        %v852 = vunpack.c.l.b16 %v772
        %v853 = vunpack.c.h.b16 %v772
        %v854 = vunpack.c.l.b16 %v773
        %v855 = vunpack.c.h.b16 %v773
        %v856 = vunpack.c.l.b16 %v774
        %v857 = vunpack.c.h.b16 %v774
        %v858 = vunpack.c.l.b16 %v775
        %v859 = vunpack.c.h.b16 %v775
        %v860 = vunpack.c.l.b16 %v776
        %v861 = vunpack.c.h.b16 %v776
        %v862 = vunpack.c.l.b16 %v777
        %v863 = vunpack.c.h.b16 %v777
        %v864 = vunpack.c.l.b16 %v778
        %v865 = vunpack.c.h.b16 %v778
        %v866 = vunpack.c.l.b16 %v779
        %v867 = vunpack.c.h.b16 %v779
        %v868 = vunpack.c.l.b16 %v780
        %v869 = vunpack.c.h.b16 %v780
        %v870 = vunpack.c.l.b16 %v781
        %v871 = vunpack.c.h.b16 %v781
        %v872 = vunpack.c.l.b16 %v782
        %v873 = vunpack.c.h.b16 %v782
        %v874 = vunpack.c.l.b16 %v783
        %v875 = vunpack.c.h.b16 %v783
        %v876 = vunpack.c.l.b16 %v784
        %v877 = vunpack.c.h.b16 %v784
        %v878 = vunpack.c.l.b16 %v785
        %v879 = vunpack.c.h.b16 %v785
        %v880 = vunpack.c.l.b16 %v786
        %v881 = vunpack.c.h.b16 %v786
        %v882 = vunpack.c.l.b16 %v787
        %v883 = vunpack.c.h.b16 %v787
        %v884 = vpack.c.b16 %v854, %v852
        %v885 = vpack.c.b16 %v855, %v853
        %v886 = vpack.c.b16 %v858, %v856
        %v887 = vpack.c.b16 %v859, %v857
        %v888 = vpack.c.b16 %v862, %v860
        %v889 = vpack.c.b16 %v863, %v861
        %v890 = vpack.c.b16 %v866, %v864
        %v891 = vpack.c.b16 %v867, %v865
        %v892 = vpack.c.b16 %v870, %v868
        %v893 = vpack.c.b16 %v871, %v869
        %v894 = vpack.c.b16 %v874, %v872
        %v895 = vpack.c.b16 %v875, %v873
        %v896 = vpack.c.b16 %v878, %v876
        %v897 = vpack.c.b16 %v879, %v877
        %v898 = vpack.c.b16 %v882, %v880
        %v899 = vpack.c.b16 %v883, %v881
        %916 = vmatprep.subr.bf16.mxu0 %v885
        %917 = vmatpush1.bf16.msra.mxu0 %v884
        %918 = vmatprep.subr.bf16.mxu0 %v887
        %919 = vmatpush1.bf16.msra.mxu0 %v886
        %920 = vmatprep.subr.bf16.mxu0 %v889
        %921 = vmatpush1.bf16.msra.mxu0 %v888
        %922 = vmatprep.subr.bf16.mxu0 %v891
        %923 = vmatpush1.bf16.msra.mxu0 %v890
        %924 = vmatprep.subr.bf16.mxu0 %v893
        %925 = vmatpush1.bf16.msra.mxu0 %v892
        %926 = vmatprep.subr.bf16.mxu0 %v895
        %927 = vmatpush1.bf16.msra.mxu0 %v894
        %928 = vmatprep.subr.bf16.mxu0 %v897
        %929 = vmatpush1.bf16.msra.mxu0 %v896
        %930 = vmatprep.subr.bf16.mxu0 %v899
        %931 = vmatpush1.bf16.msra.mxu0 %v898
        %932 = vmatprep.subr.bf16.mxu0 0
        %933 = vmatpush1.bf16.msra.mxu0 0
        %934 = vmatprep.subr.bf16.mxu0 0
        %935 = vmatpush1.bf16.msra.mxu0 0
        %936 = vmatprep.subr.bf16.mxu0 0
        %937 = vmatpush1.bf16.msra.mxu0 0
        %938 = vmatprep.subr.bf16.mxu0 0
        %939 = vmatpush1.bf16.msra.mxu0 0
        %940 = vmatprep.subr.bf16.mxu0 0
        %941 = vmatpush1.bf16.msra.mxu0 0
        %942 = vmatprep.subr.bf16.mxu0 0
        %943 = vmatpush1.bf16.msra.mxu0 0
        %944 = vmatprep.subr.bf16.mxu0 0
        %945 = vmatpush1.bf16.msra.mxu0 0
        %946 = vmatprep.subr.bf16.mxu0 0
        %947 = vmatpush1.bf16.msra.mxu0 0
        %948 = vmatprep.mubr.bf16.mxu0 0
        %949 = vmatmul.mubr.bf16.gmra.mrb[0].mxu0 %v820
        %v950 = vpop.f32.mrb[0].mxu0
        %v951 = vadd.f32 0.0, %v950
        %v952 = vpop.f32.mrb[0].mxu0
        %v953 = vadd.f32 0.0, %v952
        %v954 = vpop.f32.mrb[0].mxu0
        %v955 = vadd.f32 0.0, %v954
        %v956 = vpop.f32.mrb[0].mxu0
        %v957 = vadd.f32 0.0, %v956
        %958 = vmatprep.mubr.bf16.mxu0 0
        %959 = vmatmul.mubr.bf16.gmra.mrb[0].mxu0 %v821
        %v960 = vpop.f32.mrb[0].mxu0
        %v961 = vadd.f32 0.0, %v960
        %v962 = vpop.f32.mrb[0].mxu0
        %v963 = vadd.f32 0.0, %v962
        %v964 = vpop.f32.mrb[0].mxu0
        %v965 = vadd.f32 0.0, %v964
        %v966 = vpop.f32.mrb[0].mxu0
        %v967 = vadd.f32 0.0, %v966
        %968 = vmatprep.mubr.bf16.mxu0 0
        %969 = vmatmul.mubr.bf16.gmra.mrb[0].mxu0 %v822
        %v970 = vpop.f32.mrb[0].mxu0
        %v971 = vadd.f32 0.0, %v970
        %v972 = vpop.f32.mrb[0].mxu0
        %v973 = vadd.f32 0.0, %v972
        %v974 = vpop.f32.mrb[0].mxu0
        %v975 = vadd.f32 0.0, %v974
        %v976 = vpop.f32.mrb[0].mxu0
        %v977 = vadd.f32 0.0, %v976
        %978 = vmatprep.mubr.bf16.mxu0 0
        %979 = vmatmul.mubr.bf16.gmra.mrb[0].mxu0 %v823
        %v980 = vpop.f32.mrb[0].mxu0
        %v981 = vadd.f32 0.0, %v980
        %v982 = vpop.f32.mrb[0].mxu0
        %v983 = vadd.f32 0.0, %v982
        %v984 = vpop.f32.mrb[0].mxu0
        %v985 = vadd.f32 0.0, %v984
        %v986 = vpop.f32.mrb[0].mxu0
        %v987 = vadd.f32 0.0, %v986
        %988 = vmatprep.mubr.bf16.mxu0 0
        %989 = vmatmul.mubr.bf16.gmra.mrb[0].mxu0 %v824
        %v990 = vpop.f32.mrb[0].mxu0
        %v991 = vadd.f32 0.0, %v990
        %v992 = vpop.f32.mrb[0].mxu0
        %v993 = vadd.f32 0.0, %v992
        %v994 = vpop.f32.mrb[0].mxu0
        %v995 = vadd.f32 0.0, %v994
        %v996 = vpop.f32.mrb[0].mxu0
        %v997 = vadd.f32 0.0, %v996
        %998 = vmatprep.mubr.bf16.mxu0 0
        %999 = vmatmul.mubr.bf16.gmra.mrb[0].mxu0 %v825
        %v1000 = vpop.f32.mrb[0].mxu0
        %v1001 = vadd.f32 0.0, %v1000
        %v1002 = vpop.f32.mrb[0].mxu0
        %v1003 = vadd.f32 0.0, %v1002
        %v1004 = vpop.f32.mrb[0].mxu0
        %v1005 = vadd.f32 0.0, %v1004
        %v1006 = vpop.f32.mrb[0].mxu0
        %v1007 = vadd.f32 0.0, %v1006
        %1008 = vmatprep.mubr.bf16.mxu0 0
        %1009 = vmatmul.mubr.bf16.gmra.mrb[0].mxu0 %v826
        %v1010 = vpop.f32.mrb[0].mxu0
        %v1011 = vadd.f32 0.0, %v1010
        %v1012 = vpop.f32.mrb[0].mxu0
        %v1013 = vadd.f32 0.0, %v1012
        %v1014 = vpop.f32.mrb[0].mxu0
        %v1015 = vadd.f32 0.0, %v1014
        %v1016 = vpop.f32.mrb[0].mxu0
        %v1017 = vadd.f32 0.0, %v1016
        %1018 = vmatprep.mubr.bf16.mxu0 0
        %1019 = vmatmul.mubr.bf16.gmra.mrb[0].mxu0 %v827
        %v1020 = vpop.f32.mrb[0].mxu0
        %v1021 = vadd.f32 0.0, %v1020
        %v1022 = vpop.f32.mrb[0].mxu0
        %v1023 = vadd.f32 0.0, %v1022
        %v1024 = vpop.f32.mrb[0].mxu0
        %v1025 = vadd.f32 0.0, %v1024
        %v1026 = vpop.f32.mrb[0].mxu0
        %v1027 = vadd.f32 0.0, %v1026
        %1028 = vdwg.mxu0
        %v1029 = vadd.f32 %v679, %v953
        %v1030 = vadd.f32 %v683, %v957
        %v1031 = vadd.f32 %v689, %v963
        %v1032 = vadd.f32 %v693, %v967
        %v1033 = vadd.f32 %v699, %v973
        %v1034 = vadd.f32 %v703, %v977
        %v1035 = vadd.f32 %v709, %v983
        %v1036 = vadd.f32 %v713, %v987
        %v1037 = vadd.f32 %v719, %v993
        %v1038 = vadd.f32 %v723, %v997
        %v1039 = vadd.f32 %v729, %v1003
        %v1040 = vadd.f32 %v733, %v1007
        %v1041 = vadd.f32 %v739, %v1013
        %v1042 = vadd.f32 %v743, %v1017
        %v1043 = vadd.f32 %v749, %v1023
        %v1044 = vadd.f32 %v753, %v1027
        %s1045 = scalar_lea.vmem %s5, 2
        %v1046 = vld [vmem:[%s1045] sm:$0x1]
        %v1048 = vlaneseq
        %v1049 = vshrl.u32 %v1048, 7
        %v1050 = vsub.s32 0, %v1049
        %v1051 = vrot.slane %v1046, %v1050
        %v1053 = vadd.f32 %v1029, %v1051
        %v1054 = vadd.f32 %v1030, %v1051
        %v1055 = vadd.f32 %v1031, %v1051
        %v1056 = vadd.f32 %v1032, %v1051
        %v1057 = vadd.f32 %v1033, %v1051
        %v1058 = vadd.f32 %v1034, %v1051
        %v1059 = vadd.f32 %v1035, %v1051
        %v1060 = vadd.f32 %v1036, %v1051
        %v1061 = vadd.f32 %v1037, %v1051
        %v1062 = vadd.f32 %v1038, %v1051
        %v1063 = vadd.f32 %v1039, %v1051
        %v1064 = vadd.f32 %v1040, %v1051
        %v1065 = vadd.f32 %v1041, %v1051
        %v1066 = vadd.f32 %v1042, %v1051
        %v1067 = vadd.f32 %v1043, %v1051
        %v1068 = vadd.f32 %v1044, %v1051
        %v1069 = vtanh.pop %v1053
        %v1070 = vtanh.pop %v1054
        %v1071 = vtanh.pop %v1055
        %v1072 = vtanh.pop %v1056
        %v1073 = vtanh.pop %v1057
        %v1074 = vtanh.pop %v1058
        %v1075 = vtanh.pop %v1059
        %v1076 = vtanh.pop %v1060
        %v1077 = vtanh.pop %v1061
        %v1078 = vtanh.pop %v1062
        %v1079 = vtanh.pop %v1063
        %v1080 = vtanh.pop %v1064
        %v1081 = vtanh.pop %v1065
        %v1082 = vtanh.pop %v1066
        %v1083 = vtanh.pop %v1067
        %v1084 = vtanh.pop %v1068
        %v1085 = vld [vmem:[%s412] sm:$0xf]
        %v1086 = vld [vmem:[%s412 + $0x4] sm:$0xf]
        %v1087 = vld [vmem:[%s412 + $0x8] sm:$0xf]
        %v1088 = vld [vmem:[%s412 + $0xc] sm:$0xf]
        %v1089 = vld [vmem:[%s412 + $0x10] sm:$0xf]
        %v1090 = vld [vmem:[%s412 + $0x14] sm:$0xf]
        %v1091 = vld [vmem:[%s412 + $0x18] sm:$0xf]
        %v1092 = vld [vmem:[%s412 + $0x1c] sm:$0xf]
        %v1093 = vld [vmem:[%s412 + $0x20] sm:$0xf]
        %v1094 = vld [vmem:[%s412 + $0x24] sm:$0xf]
        %v1095 = vld [vmem:[%s412 + $0x28] sm:$0xf]
        %v1096 = vld [vmem:[%s412 + $0x2c] sm:$0xf]
        %v1097 = vld [vmem:[%s412 + $0x30] sm:$0xf]
        %v1098 = vld [vmem:[%s412 + $0x34] sm:$0xf]
        %v1099 = vld [vmem:[%s412 + $0x38] sm:$0xf]
        %v1100 = vld [vmem:[%s412 + $0x3c] sm:$0xf]
        %v1101 = vunpack.c.l.bf16 %v1085
        %v1102 = vunpack.c.l.bf16 %v1086
        %v1103 = vunpack.c.l.bf16 %v1087
        %v1104 = vunpack.c.l.bf16 %v1088
        %v1105 = vunpack.c.l.bf16 %v1089
        %v1106 = vunpack.c.l.bf16 %v1090
        %v1107 = vunpack.c.l.bf16 %v1091
        %v1108 = vunpack.c.l.bf16 %v1092
        %v1109 = vunpack.c.l.bf16 %v1093
        %v1110 = vunpack.c.l.bf16 %v1094
        %v1111 = vunpack.c.l.bf16 %v1095
        %v1112 = vunpack.c.l.bf16 %v1096
        %v1113 = vunpack.c.l.bf16 %v1097
        %v1114 = vunpack.c.l.bf16 %v1098
        %v1115 = vunpack.c.l.bf16 %v1099
        %v1116 = vunpack.c.l.bf16 %v1100
        %v1117 = vmul.f32 %v1069, %v1101
        %v1118 = vmul.f32 %v1070, %v1102
        %v1119 = vmul.f32 %v1071, %v1103
        %v1120 = vmul.f32 %v1072, %v1104
        %v1121 = vmul.f32 %v1073, %v1105
        %v1122 = vmul.f32 %v1074, %v1106
        %v1123 = vmul.f32 %v1075, %v1107
        %v1124 = vmul.f32 %v1076, %v1108
        %v1125 = vmul.f32 %v1077, %v1109
        %v1126 = vmul.f32 %v1078, %v1110
        %v1127 = vmul.f32 %v1079, %v1111
        %v1128 = vmul.f32 %v1080, %v1112
        %v1129 = vmul.f32 %v1081, %v1113
        %v1130 = vmul.f32 %v1082, %v1114
        %v1131 = vmul.f32 %v1083, %v1115
        %v1132 = vmul.f32 %v1084, %v1116
        %v1133 = vpack.c.bf16 %v1118, %v1117
        %v1134 = vpack.c.bf16 %v1120, %v1119
        %v1135 = vpack.c.bf16 %v1122, %v1121
        %v1136 = vpack.c.bf16 %v1124, %v1123
        %v1137 = vpack.c.bf16 %v1126, %v1125
        %v1138 = vpack.c.bf16 %v1128, %v1127
        %v1139 = vpack.c.bf16 %v1130, %v1129
        %v1140 = vpack.c.bf16 %v1132, %v1131
        %s1141 = scalar_lea.vmem [#allocation10], 128
        %v1142 = vld [vmem:[%s1141] sm:$0xf]
        %v1143 = vld [vmem:[%s1141 + $0x4] sm:$0xf]
        %v1144 = vld [vmem:[%s1141 + $0x8] sm:$0xf]
        %v1145 = vld [vmem:[%s1141 + $0xc] sm:$0xf]
        %v1146 = vld [vmem:[%s1141 + $0x10] sm:$0xf]
        %v1147 = vld [vmem:[%s1141 + $0x14] sm:$0xf]
        %v1148 = vld [vmem:[%s1141 + $0x18] sm:$0xf]
        %v1149 = vld [vmem:[%s1141 + $0x1c] sm:$0xf]
        %v1150 = vld [vmem:[%s1141 + $0x20] sm:$0xf]
        %v1151 = vld [vmem:[%s1141 + $0x24] sm:$0xf]
        %v1152 = vld [vmem:[%s1141 + $0x28] sm:$0xf]
        %v1153 = vld [vmem:[%s1141 + $0x2c] sm:$0xf]
        %v1154 = vld [vmem:[%s1141 + $0x30] sm:$0xf]
        %v1155 = vld [vmem:[%s1141 + $0x34] sm:$0xf]
        %v1156 = vld [vmem:[%s1141 + $0x38] sm:$0xf]
        %v1157 = vld [vmem:[%s1141 + $0x3c] sm:$0xf]
        %s1158 = scalar_lea.vmem %s6, 2
        %v1159 = vld [vmem:[%s1158] sm:$0x1]
        %v1161 = vlaneseq
        %v1162 = vshrl.u32 %v1161, 7
        %v1163 = vsub.s32 0, %v1162
        %v1164 = vrot.slane %v1159, %v1163
        %v1182 = vunpack.c.l.b16 %v1142
        %v1183 = vunpack.c.l.b16 %v1143
        %v1184 = vunpack.c.l.b16 %v1144
        %v1185 = vunpack.c.l.b16 %v1145
        %v1186 = vunpack.c.l.b16 %v1146
        %v1187 = vunpack.c.l.b16 %v1147
        %v1188 = vunpack.c.l.b16 %v1148
        %v1189 = vunpack.c.l.b16 %v1149
        %v1190 = vunpack.c.l.b16 %v1150
        %v1191 = vunpack.c.l.b16 %v1151
        %v1192 = vunpack.c.l.b16 %v1152
        %v1193 = vunpack.c.l.b16 %v1153
        %v1194 = vunpack.c.l.b16 %v1154
        %v1195 = vunpack.c.l.b16 %v1155
        %v1196 = vunpack.c.l.b16 %v1156
        %v1197 = vunpack.c.l.b16 %v1157
        %v1198 = vpack.c.b16 %v1183, %v1182
        %v1199 = vpack.c.b16 %v1185, %v1184
        %v1200 = vpack.c.b16 %v1187, %v1186
        %v1201 = vpack.c.b16 %v1189, %v1188
        %v1202 = vpack.c.b16 %v1191, %v1190
        %v1203 = vpack.c.b16 %v1193, %v1192
        %v1204 = vpack.c.b16 %v1195, %v1194
        %v1205 = vpack.c.b16 %v1197, %v1196
        %1214 = vmatprep.subr.bf16.mxu0 0
        %1215 = vmatpush1.bf16.msra.mxu0 %v1198
        %1216 = vmatprep.subr.bf16.mxu0 0
        %1217 = vmatpush1.bf16.msra.mxu0 %v1199
        %1218 = vmatprep.subr.bf16.mxu0 0
        %1219 = vmatpush1.bf16.msra.mxu0 %v1200
        %1220 = vmatprep.subr.bf16.mxu0 0
        %1221 = vmatpush1.bf16.msra.mxu0 %v1201
        %1222 = vmatprep.subr.bf16.mxu0 0
        %1223 = vmatpush1.bf16.msra.mxu0 %v1202
        %1224 = vmatprep.subr.bf16.mxu0 0
        %1225 = vmatpush1.bf16.msra.mxu0 %v1203
        %1226 = vmatprep.subr.bf16.mxu0 0
        %1227 = vmatpush1.bf16.msra.mxu0 %v1204
        %1228 = vmatprep.subr.bf16.mxu0 0
        %1229 = vmatpush1.bf16.msra.mxu0 %v1205
        %1230 = vmatprep.subr.bf16.mxu0 0
        %1231 = vmatpush1.bf16.msra.mxu0 0
        %1232 = vmatprep.subr.bf16.mxu0 0
        %1233 = vmatpush1.bf16.msra.mxu0 0
        %1234 = vmatprep.subr.bf16.mxu0 0
        %1235 = vmatpush1.bf16.msra.mxu0 0
        %1236 = vmatprep.subr.bf16.mxu0 0
        %1237 = vmatpush1.bf16.msra.mxu0 0
        %1238 = vmatprep.subr.bf16.mxu0 0
        %1239 = vmatpush1.bf16.msra.mxu0 0
        %1240 = vmatprep.subr.bf16.mxu0 0
        %1241 = vmatpush1.bf16.msra.mxu0 0
        %1242 = vmatprep.subr.bf16.mxu0 0
        %1243 = vmatpush1.bf16.msra.mxu0 0
        %1244 = vmatprep.subr.bf16.mxu0 0
        %1245 = vmatpush1.bf16.msra.mxu0 0
        %1246 = vmatprep.mubr.bf16.mxu0 0
        %1247 = vmatmul.mubr.bf16.gmra.mrb[0].mxu0 %v1133
        %v1248 = vpop.f32.mrb[0].mxu0
        %v1249 = vadd.f32 %v1164, %v1248
        %v1250 = vpop.f32.mrb[0].mxu0
        %v1251 = vpop.f32.mrb[0].mxu0
        %v1252 = vadd.f32 %v1164, %v1251
        %v1253 = vpop.f32.mrb[0].mxu0
        %1254 = vmatprep.mubr.bf16.mxu0 0
        %1255 = vmatmul.mubr.bf16.gmra.mrb[0].mxu0 %v1134
        %v1256 = vpop.f32.mrb[0].mxu0
        %v1257 = vadd.f32 %v1164, %v1256
        %v1258 = vpop.f32.mrb[0].mxu0
        %v1259 = vpop.f32.mrb[0].mxu0
        %v1260 = vadd.f32 %v1164, %v1259
        %v1261 = vpop.f32.mrb[0].mxu0
        %1262 = vmatprep.mubr.bf16.mxu0 0
        %1263 = vmatmul.mubr.bf16.gmra.mrb[0].mxu0 %v1135
        %v1264 = vpop.f32.mrb[0].mxu0
        %v1265 = vadd.f32 %v1164, %v1264
        %v1266 = vpop.f32.mrb[0].mxu0
        %v1267 = vpop.f32.mrb[0].mxu0
        %v1268 = vadd.f32 %v1164, %v1267
        %v1269 = vpop.f32.mrb[0].mxu0
        %1270 = vmatprep.mubr.bf16.mxu0 0
        %1271 = vmatmul.mubr.bf16.gmra.mrb[0].mxu0 %v1136
        %v1272 = vpop.f32.mrb[0].mxu0
        %v1273 = vadd.f32 %v1164, %v1272
        %v1274 = vpop.f32.mrb[0].mxu0
        %v1275 = vpop.f32.mrb[0].mxu0
        %v1276 = vadd.f32 %v1164, %v1275
        %v1277 = vpop.f32.mrb[0].mxu0
        %1278 = vmatprep.mubr.bf16.mxu0 0
        %1279 = vmatmul.mubr.bf16.gmra.mrb[0].mxu0 %v1137
        %v1280 = vpop.f32.mrb[0].mxu0
        %v1281 = vadd.f32 %v1164, %v1280
        %v1282 = vpop.f32.mrb[0].mxu0
        %v1283 = vpop.f32.mrb[0].mxu0
        %v1284 = vadd.f32 %v1164, %v1283
        %v1285 = vpop.f32.mrb[0].mxu0
        %1286 = vmatprep.mubr.bf16.mxu0 0
        %1287 = vmatmul.mubr.bf16.gmra.mrb[0].mxu0 %v1138
        %v1288 = vpop.f32.mrb[0].mxu0
        %v1289 = vadd.f32 %v1164, %v1288
        %v1290 = vpop.f32.mrb[0].mxu0
        %v1291 = vpop.f32.mrb[0].mxu0
        %v1292 = vadd.f32 %v1164, %v1291
        %v1293 = vpop.f32.mrb[0].mxu0
        %1294 = vmatprep.mubr.bf16.mxu0 0
        %1295 = vmatmul.mubr.bf16.gmra.mrb[0].mxu0 %v1139
        %v1296 = vpop.f32.mrb[0].mxu0
        %v1297 = vadd.f32 %v1164, %v1296
        %v1298 = vpop.f32.mrb[0].mxu0
        %v1299 = vpop.f32.mrb[0].mxu0
        %v1300 = vadd.f32 %v1164, %v1299
        %v1301 = vpop.f32.mrb[0].mxu0
        %1302 = vmatprep.mubr.bf16.mxu0 0
        %1303 = vmatmul.mubr.bf16.gmra.mrb[0].mxu0 %v1140
        %v1304 = vpop.f32.mrb[0].mxu0
        %v1305 = vadd.f32 %v1164, %v1304
        %v1306 = vpop.f32.mrb[0].mxu0
        %v1307 = vpop.f32.mrb[0].mxu0
        %v1308 = vadd.f32 %v1164, %v1307
        %v1309 = vpop.f32.mrb[0].mxu0
        %1310 = vdwg.mxu0
        %v1311 = vmax.f32 %v1249, 0.0
        %v1312 = vmax.f32 %v1252, 0.0
        %v1313 = vmax.f32 %v1257, 0.0
        %v1314 = vmax.f32 %v1260, 0.0
        %v1315 = vmax.f32 %v1265, 0.0
        %v1316 = vmax.f32 %v1268, 0.0
        %v1317 = vmax.f32 %v1273, 0.0
        %v1318 = vmax.f32 %v1276, 0.0
        %v1319 = vmax.f32 %v1281, 0.0
        %v1320 = vmax.f32 %v1284, 0.0
        %v1321 = vmax.f32 %v1289, 0.0
        %v1322 = vmax.f32 %v1292, 0.0
        %v1323 = vmax.f32 %v1297, 0.0
        %v1324 = vmax.f32 %v1300, 0.0
        %v1325 = vmax.f32 %v1305, 0.0
        %v1326 = vmax.f32 %v1308, 0.0
        %1327 = vst [vmem:[%s474] sm:$0xff] %v1311
        %1328 = vst [vmem:[%s474 + $0x8] sm:$0xff] %v1312
        %1329 = vst [vmem:[%s474 + $0x10] sm:$0xff] %v1313
        %1330 = vst [vmem:[%s474 + $0x18] sm:$0xff] %v1314
        %1331 = vst [vmem:[%s474 + $0x20] sm:$0xff] %v1315
        %1332 = vst [vmem:[%s474 + $0x28] sm:$0xff] %v1316
        %1333 = vst [vmem:[%s474 + $0x30] sm:$0xff] %v1317
        %1334 = vst [vmem:[%s474 + $0x38] sm:$0xff] %v1318
        %1335 = vst [vmem:[%s474 + $0x40] sm:$0xff] %v1319
        %1336 = vst [vmem:[%s474 + $0x48] sm:$0xff] %v1320
        %1337 = vst [vmem:[%s474 + $0x50] sm:$0xff] %v1321
        %1338 = vst [vmem:[%s474 + $0x58] sm:$0xff] %v1322
        %1339 = vst [vmem:[%s474 + $0x60] sm:$0xff] %v1323
        %1340 = vst [vmem:[%s474 + $0x68] sm:$0xff] %v1324
        %1341 = vst [vmem:[%s474 + $0x70] sm:$0xff] %v1325
        %1342 = vst [vmem:[%s474 + $0x78] sm:$0xff] %v1326
        %v1343 = vld [vmem:[%s412] sm:$0xf]
        %v1344 = vld [vmem:[%s412 + $0x4] sm:$0xf]
        %v1345 = vld [vmem:[%s412 + $0x8] sm:$0xf]
        %v1346 = vld [vmem:[%s412 + $0xc] sm:$0xf]
        %v1347 = vld [vmem:[%s412 + $0x10] sm:$0xf]
        %v1348 = vld [vmem:[%s412 + $0x14] sm:$0xf]
        %v1349 = vld [vmem:[%s412 + $0x18] sm:$0xf]
        %v1350 = vld [vmem:[%s412 + $0x1c] sm:$0xf]
        %v1351 = vld [vmem:[%s412 + $0x20] sm:$0xf]
        %v1352 = vld [vmem:[%s412 + $0x24] sm:$0xf]
        %v1353 = vld [vmem:[%s412 + $0x28] sm:$0xf]
        %v1354 = vld [vmem:[%s412 + $0x2c] sm:$0xf]
        %v1355 = vld [vmem:[%s412 + $0x30] sm:$0xf]
        %v1356 = vld [vmem:[%s412 + $0x34] sm:$0xf]
        %v1357 = vld [vmem:[%s412 + $0x38] sm:$0xf]
        %v1358 = vld [vmem:[%s412 + $0x3c] sm:$0xf]
        %s1359 = scalar_lea.vmem [#allocation8], 256
        %v1360 = vld [vmem:[%s1359] sm:$0xff]
        %v1361 = vld [vmem:[%s1359 + $0x8] sm:$0xff]
        %v1362 = vld [vmem:[%s1359 + $0x10] sm:$0xff]
        %v1363 = vld [vmem:[%s1359 + $0x18] sm:$0xff]
        %v1364 = vld [vmem:[%s1359 + $0x20] sm:$0xff]
        %v1365 = vld [vmem:[%s1359 + $0x28] sm:$0xff]
        %v1366 = vld [vmem:[%s1359 + $0x30] sm:$0xff]
        %v1367 = vld [vmem:[%s1359 + $0x38] sm:$0xff]
        %v1368 = vld [vmem:[%s1359 + $0x40] sm:$0xff]
        %v1369 = vld [vmem:[%s1359 + $0x48] sm:$0xff]
        %v1370 = vld [vmem:[%s1359 + $0x50] sm:$0xff]
        %v1371 = vld [vmem:[%s1359 + $0x58] sm:$0xff]
        %v1372 = vld [vmem:[%s1359 + $0x60] sm:$0xff]
        %v1373 = vld [vmem:[%s1359 + $0x68] sm:$0xff]
        %v1374 = vld [vmem:[%s1359 + $0x70] sm:$0xff]
        %v1375 = vld [vmem:[%s1359 + $0x78] sm:$0xff]
        %v1392 = vunpack.c.l.b16 %v1343
        %v1393 = vunpack.c.l.b16 %v1344
        %v1394 = vunpack.c.l.b16 %v1345
        %v1395 = vunpack.c.l.b16 %v1346
        %v1396 = vunpack.c.l.b16 %v1347
        %v1397 = vunpack.c.l.b16 %v1348
        %v1398 = vunpack.c.l.b16 %v1349
        %v1399 = vunpack.c.l.b16 %v1350
        %v1400 = vunpack.c.l.b16 %v1351
        %v1401 = vunpack.c.l.b16 %v1352
        %v1402 = vunpack.c.l.b16 %v1353
        %v1403 = vunpack.c.l.b16 %v1354
        %v1404 = vunpack.c.l.b16 %v1355
        %v1405 = vunpack.c.l.b16 %v1356
        %v1406 = vunpack.c.l.b16 %v1357
        %v1407 = vunpack.c.l.b16 %v1358
        %v1408 = vpack.c.b16 %v1393, %v1392
        %v1409 = vpack.c.b16 %v1395, %v1394
        %v1410 = vpack.c.b16 %v1397, %v1396
        %v1411 = vpack.c.b16 %v1399, %v1398
        %v1412 = vpack.c.b16 %v1401, %v1400
        %v1413 = vpack.c.b16 %v1403, %v1402
        %v1414 = vpack.c.b16 %v1405, %v1404
        %v1415 = vpack.c.b16 %v1407, %v1406
        %v1440 = vunpack.c.l.b16 %v1360
        %v1441 = vunpack.c.h.b16 %v1360
        %v1442 = vunpack.c.l.b16 %v1361
        %v1443 = vunpack.c.h.b16 %v1361
        %v1444 = vunpack.c.l.b16 %v1362
        %v1445 = vunpack.c.h.b16 %v1362
        %v1446 = vunpack.c.l.b16 %v1363
        %v1447 = vunpack.c.h.b16 %v1363
        %v1448 = vunpack.c.l.b16 %v1364
        %v1449 = vunpack.c.h.b16 %v1364
        %v1450 = vunpack.c.l.b16 %v1365
        %v1451 = vunpack.c.h.b16 %v1365
        %v1452 = vunpack.c.l.b16 %v1366
        %v1453 = vunpack.c.h.b16 %v1366
        %v1454 = vunpack.c.l.b16 %v1367
        %v1455 = vunpack.c.h.b16 %v1367
        %v1456 = vunpack.c.l.b16 %v1368
        %v1457 = vunpack.c.h.b16 %v1368
        %v1458 = vunpack.c.l.b16 %v1369
        %v1459 = vunpack.c.h.b16 %v1369
        %v1460 = vunpack.c.l.b16 %v1370
        %v1461 = vunpack.c.h.b16 %v1370
        %v1462 = vunpack.c.l.b16 %v1371
        %v1463 = vunpack.c.h.b16 %v1371
        %v1464 = vunpack.c.l.b16 %v1372
        %v1465 = vunpack.c.h.b16 %v1372
        %v1466 = vunpack.c.l.b16 %v1373
        %v1467 = vunpack.c.h.b16 %v1373
        %v1468 = vunpack.c.l.b16 %v1374
        %v1469 = vunpack.c.h.b16 %v1374
        %v1470 = vunpack.c.l.b16 %v1375
        %v1471 = vunpack.c.h.b16 %v1375
        %v1472 = vpack.c.b16 %v1442, %v1440
        %v1473 = vpack.c.b16 %v1443, %v1441
        %v1474 = vpack.c.b16 %v1446, %v1444
        %v1475 = vpack.c.b16 %v1447, %v1445
        %v1476 = vpack.c.b16 %v1450, %v1448
        %v1477 = vpack.c.b16 %v1451, %v1449
        %v1478 = vpack.c.b16 %v1454, %v1452
        %v1479 = vpack.c.b16 %v1455, %v1453
        %v1480 = vpack.c.b16 %v1458, %v1456
        %v1481 = vpack.c.b16 %v1459, %v1457
        %v1482 = vpack.c.b16 %v1462, %v1460
        %v1483 = vpack.c.b16 %v1463, %v1461
        %v1484 = vpack.c.b16 %v1466, %v1464
        %v1485 = vpack.c.b16 %v1467, %v1465
        %v1486 = vpack.c.b16 %v1470, %v1468
        %v1487 = vpack.c.b16 %v1471, %v1469
        %1504 = vmatprep.subr.bf16.mxu0 %v1473
        %1505 = vmatpush1.bf16.msra.mxu0 %v1472
        %1506 = vmatprep.subr.bf16.mxu0 %v1475
        %1507 = vmatpush1.bf16.msra.mxu0 %v1474
        %1508 = vmatprep.subr.bf16.mxu0 %v1477
        %1509 = vmatpush1.bf16.msra.mxu0 %v1476
        %1510 = vmatprep.subr.bf16.mxu0 %v1479
        %1511 = vmatpush1.bf16.msra.mxu0 %v1478
        %1512 = vmatprep.subr.bf16.mxu0 %v1481
        %1513 = vmatpush1.bf16.msra.mxu0 %v1480
        %1514 = vmatprep.subr.bf16.mxu0 %v1483
        %1515 = vmatpush1.bf16.msra.mxu0 %v1482
        %1516 = vmatprep.subr.bf16.mxu0 %v1485
        %1517 = vmatpush1.bf16.msra.mxu0 %v1484
        %1518 = vmatprep.subr.bf16.mxu0 %v1487
        %1519 = vmatpush1.bf16.msra.mxu0 %v1486
        %1520 = vmatprep.subr.bf16.mxu0 0
        %1521 = vmatpush1.bf16.msra.mxu0 0
        %1522 = vmatprep.subr.bf16.mxu0 0
        %1523 = vmatpush1.bf16.msra.mxu0 0
        %1524 = vmatprep.subr.bf16.mxu0 0
        %1525 = vmatpush1.bf16.msra.mxu0 0
        %1526 = vmatprep.subr.bf16.mxu0 0
        %1527 = vmatpush1.bf16.msra.mxu0 0
        %1528 = vmatprep.subr.bf16.mxu0 0
        %1529 = vmatpush1.bf16.msra.mxu0 0
        %1530 = vmatprep.subr.bf16.mxu0 0
        %1531 = vmatpush1.bf16.msra.mxu0 0
        %1532 = vmatprep.subr.bf16.mxu0 0
        %1533 = vmatpush1.bf16.msra.mxu0 0
        %1534 = vmatprep.subr.bf16.mxu0 0
        %1535 = vmatpush1.bf16.msra.mxu0 0
        %1536 = vmatprep.mubr.bf16.mxu0 0
        %1537 = vmatmul.mubr.bf16.gmra.mrb[0].mxu0 %v1408
        %v1538 = vpop.f32.mrb[0].mxu0
        %v1539 = vadd.f32 0.0, %v1538
        %v1540 = vpop.f32.mrb[0].mxu0
        %v1541 = vadd.f32 0.0, %v1540
        %v1542 = vpop.f32.mrb[0].mxu0
        %v1543 = vadd.f32 0.0, %v1542
        %v1544 = vpop.f32.mrb[0].mxu0
        %v1545 = vadd.f32 0.0, %v1544
        %1546 = vmatprep.mubr.bf16.mxu0 0
        %1547 = vmatmul.mubr.bf16.gmra.mrb[0].mxu0 %v1409
        %v1548 = vpop.f32.mrb[0].mxu0
        %v1549 = vadd.f32 0.0, %v1548
        %v1550 = vpop.f32.mrb[0].mxu0
        %v1551 = vadd.f32 0.0, %v1550
        %v1552 = vpop.f32.mrb[0].mxu0
        %v1553 = vadd.f32 0.0, %v1552
        %v1554 = vpop.f32.mrb[0].mxu0
        %v1555 = vadd.f32 0.0, %v1554
        %1556 = vmatprep.mubr.bf16.mxu0 0
        %1557 = vmatmul.mubr.bf16.gmra.mrb[0].mxu0 %v1410
        %v1558 = vpop.f32.mrb[0].mxu0
        %v1559 = vadd.f32 0.0, %v1558
        %v1560 = vpop.f32.mrb[0].mxu0
        %v1561 = vadd.f32 0.0, %v1560
        %v1562 = vpop.f32.mrb[0].mxu0
        %v1563 = vadd.f32 0.0, %v1562
        %v1564 = vpop.f32.mrb[0].mxu0
        %v1565 = vadd.f32 0.0, %v1564
        %1566 = vmatprep.mubr.bf16.mxu0 0
        %1567 = vmatmul.mubr.bf16.gmra.mrb[0].mxu0 %v1411
        %v1568 = vpop.f32.mrb[0].mxu0
        %v1569 = vadd.f32 0.0, %v1568
        %v1570 = vpop.f32.mrb[0].mxu0
        %v1571 = vadd.f32 0.0, %v1570
        %v1572 = vpop.f32.mrb[0].mxu0
        %v1573 = vadd.f32 0.0, %v1572
        %v1574 = vpop.f32.mrb[0].mxu0
        %v1575 = vadd.f32 0.0, %v1574
        %1576 = vmatprep.mubr.bf16.mxu0 0
        %1577 = vmatmul.mubr.bf16.gmra.mrb[0].mxu0 %v1412
        %v1578 = vpop.f32.mrb[0].mxu0
        %v1579 = vadd.f32 0.0, %v1578
        %v1580 = vpop.f32.mrb[0].mxu0
        %v1581 = vadd.f32 0.0, %v1580
        %v1582 = vpop.f32.mrb[0].mxu0
        %v1583 = vadd.f32 0.0, %v1582
        %v1584 = vpop.f32.mrb[0].mxu0
        %v1585 = vadd.f32 0.0, %v1584
        %1586 = vmatprep.mubr.bf16.mxu0 0
        %1587 = vmatmul.mubr.bf16.gmra.mrb[0].mxu0 %v1413
        %v1588 = vpop.f32.mrb[0].mxu0
        %v1589 = vadd.f32 0.0, %v1588
        %v1590 = vpop.f32.mrb[0].mxu0
        %v1591 = vadd.f32 0.0, %v1590
        %v1592 = vpop.f32.mrb[0].mxu0
        %v1593 = vadd.f32 0.0, %v1592
        %v1594 = vpop.f32.mrb[0].mxu0
        %v1595 = vadd.f32 0.0, %v1594
        %1596 = vmatprep.mubr.bf16.mxu0 0
        %1597 = vmatmul.mubr.bf16.gmra.mrb[0].mxu0 %v1414
        %v1598 = vpop.f32.mrb[0].mxu0
        %v1599 = vadd.f32 0.0, %v1598
        %v1600 = vpop.f32.mrb[0].mxu0
        %v1601 = vadd.f32 0.0, %v1600
        %v1602 = vpop.f32.mrb[0].mxu0
        %v1603 = vadd.f32 0.0, %v1602
        %v1604 = vpop.f32.mrb[0].mxu0
        %v1605 = vadd.f32 0.0, %v1604
        %1606 = vmatprep.mubr.bf16.mxu0 0
        %1607 = vmatmul.mubr.bf16.gmra.mrb[0].mxu0 %v1415
        %v1608 = vpop.f32.mrb[0].mxu0
        %v1609 = vadd.f32 0.0, %v1608
        %v1610 = vpop.f32.mrb[0].mxu0
        %v1611 = vadd.f32 0.0, %v1610
        %v1612 = vpop.f32.mrb[0].mxu0
        %v1613 = vadd.f32 0.0, %v1612
        %v1614 = vpop.f32.mrb[0].mxu0
        %v1615 = vadd.f32 0.0, %v1614
        %1616 = vdwg.mxu0
        %v1617 = vadd.f32 %v951, %v1539
        %v1618 = vadd.f32 %v955, %v1543
        %v1619 = vadd.f32 %v961, %v1549
        %v1620 = vadd.f32 %v965, %v1553
        %v1621 = vadd.f32 %v971, %v1559
        %v1622 = vadd.f32 %v975, %v1563
        %v1623 = vadd.f32 %v981, %v1569
        %v1624 = vadd.f32 %v985, %v1573
        %v1625 = vadd.f32 %v991, %v1579
        %v1626 = vadd.f32 %v995, %v1583
        %v1627 = vadd.f32 %v1001, %v1589
        %v1628 = vadd.f32 %v1005, %v1593
        %v1629 = vadd.f32 %v1011, %v1599
        %v1630 = vadd.f32 %v1015, %v1603
        %v1631 = vadd.f32 %v1021, %v1609
        %v1632 = vadd.f32 %v1025, %v1613
        %v1633 = vld [vmem:[%s5] sm:$0x1]
        %v1635 = vlaneseq
        %v1636 = vshrl.u32 %v1635, 7
        %v1637 = vsub.s32 0, %v1636
        %v1638 = vrot.slane %v1633, %v1637
        %v1640 = vadd.f32 %v1617, %v1638
        %v1641 = vadd.f32 %v1618, %v1638
        %v1642 = vadd.f32 %v1619, %v1638
        %v1643 = vadd.f32 %v1620, %v1638
        %v1644 = vadd.f32 %v1621, %v1638
        %v1645 = vadd.f32 %v1622, %v1638
        %v1646 = vadd.f32 %v1623, %v1638
        %v1647 = vadd.f32 %v1624, %v1638
        %v1648 = vadd.f32 %v1625, %v1638
        %v1649 = vadd.f32 %v1626, %v1638
        %v1650 = vadd.f32 %v1627, %v1638
        %v1651 = vadd.f32 %v1628, %v1638
        %v1652 = vadd.f32 %v1629, %v1638
        %v1653 = vadd.f32 %v1630, %v1638
        %v1654 = vadd.f32 %v1631, %v1638
        %v1655 = vadd.f32 %v1632, %v1638
        %v1656 = vtanh.pop %v1640
        %v1657 = vtanh.pop %v1641
        %v1658 = vtanh.pop %v1642
        %v1659 = vtanh.pop %v1643
        %v1660 = vtanh.pop %v1644
        %v1661 = vtanh.pop %v1645
        %v1662 = vtanh.pop %v1646
        %v1663 = vtanh.pop %v1647
        %v1664 = vtanh.pop %v1648
        %v1665 = vtanh.pop %v1649
        %v1666 = vtanh.pop %v1650
        %v1667 = vtanh.pop %v1651
        %v1668 = vtanh.pop %v1652
        %v1669 = vtanh.pop %v1653
        %v1670 = vtanh.pop %v1654
        %v1671 = vtanh.pop %v1655
        %v1672 = vld [vmem:[%s394] sm:$0xf]
        %v1673 = vld [vmem:[%s394 + $0x4] sm:$0xf]
        %v1674 = vld [vmem:[%s394 + $0x8] sm:$0xf]
        %v1675 = vld [vmem:[%s394 + $0xc] sm:$0xf]
        %v1676 = vld [vmem:[%s394 + $0x10] sm:$0xf]
        %v1677 = vld [vmem:[%s394 + $0x14] sm:$0xf]
        %v1678 = vld [vmem:[%s394 + $0x18] sm:$0xf]
        %v1679 = vld [vmem:[%s394 + $0x1c] sm:$0xf]
        %v1680 = vld [vmem:[%s394 + $0x20] sm:$0xf]
        %v1681 = vld [vmem:[%s394 + $0x24] sm:$0xf]
        %v1682 = vld [vmem:[%s394 + $0x28] sm:$0xf]
        %v1683 = vld [vmem:[%s394 + $0x2c] sm:$0xf]
        %v1684 = vld [vmem:[%s394 + $0x30] sm:$0xf]
        %v1685 = vld [vmem:[%s394 + $0x34] sm:$0xf]
        %v1686 = vld [vmem:[%s394 + $0x38] sm:$0xf]
        %v1687 = vld [vmem:[%s394 + $0x3c] sm:$0xf]
        %v1688 = vunpack.c.l.bf16 %v1672
        %v1689 = vunpack.c.l.bf16 %v1673
        %v1690 = vunpack.c.l.bf16 %v1674
        %v1691 = vunpack.c.l.bf16 %v1675
        %v1692 = vunpack.c.l.bf16 %v1676
        %v1693 = vunpack.c.l.bf16 %v1677
        %v1694 = vunpack.c.l.bf16 %v1678
        %v1695 = vunpack.c.l.bf16 %v1679
        %v1696 = vunpack.c.l.bf16 %v1680
        %v1697 = vunpack.c.l.bf16 %v1681
        %v1698 = vunpack.c.l.bf16 %v1682
        %v1699 = vunpack.c.l.bf16 %v1683
        %v1700 = vunpack.c.l.bf16 %v1684
        %v1701 = vunpack.c.l.bf16 %v1685
        %v1702 = vunpack.c.l.bf16 %v1686
        %v1703 = vunpack.c.l.bf16 %v1687
        %v1704 = vmul.f32 %v1688, %v1656
        %v1705 = vmul.f32 %v1689, %v1657
        %v1706 = vmul.f32 %v1690, %v1658
        %v1707 = vmul.f32 %v1691, %v1659
        %v1708 = vmul.f32 %v1692, %v1660
        %v1709 = vmul.f32 %v1693, %v1661
        %v1710 = vmul.f32 %v1694, %v1662
        %v1711 = vmul.f32 %v1695, %v1663
        %v1712 = vmul.f32 %v1696, %v1664
        %v1713 = vmul.f32 %v1697, %v1665
        %v1714 = vmul.f32 %v1698, %v1666
        %v1715 = vmul.f32 %v1699, %v1667
        %v1716 = vmul.f32 %v1700, %v1668
        %v1717 = vmul.f32 %v1701, %v1669
        %v1718 = vmul.f32 %v1702, %v1670
        %v1719 = vmul.f32 %v1703, %v1671
        %v1720 = vpack.c.bf16 %v1705, %v1704
        %v1721 = vpack.c.bf16 %v1707, %v1706
        %v1722 = vpack.c.bf16 %v1709, %v1708
        %v1723 = vpack.c.bf16 %v1711, %v1710
        %v1724 = vpack.c.bf16 %v1713, %v1712
        %v1725 = vpack.c.bf16 %v1715, %v1714
        %v1726 = vpack.c.bf16 %v1717, %v1716
        %v1727 = vpack.c.bf16 %v1719, %v1718
        %v1728 = vld [vmem:[#allocation10] sm:$0xf]
        %v1729 = vld [vmem:[#allocation10 + $0x4] sm:$0xf]
        %v1730 = vld [vmem:[#allocation10 + $0x8] sm:$0xf]
        %v1731 = vld [vmem:[#allocation10 + $0xc] sm:$0xf]
        %v1732 = vld [vmem:[#allocation10 + $0x10] sm:$0xf]
        %v1733 = vld [vmem:[#allocation10 + $0x14] sm:$0xf]
        %v1734 = vld [vmem:[#allocation10 + $0x18] sm:$0xf]
        %v1735 = vld [vmem:[#allocation10 + $0x1c] sm:$0xf]
        %v1736 = vld [vmem:[#allocation10 + $0x20] sm:$0xf]
        %v1737 = vld [vmem:[#allocation10 + $0x24] sm:$0xf]
        %v1738 = vld [vmem:[#allocation10 + $0x28] sm:$0xf]
        %v1739 = vld [vmem:[#allocation10 + $0x2c] sm:$0xf]
        %v1740 = vld [vmem:[#allocation10 + $0x30] sm:$0xf]
        %v1741 = vld [vmem:[#allocation10 + $0x34] sm:$0xf]
        %v1742 = vld [vmem:[#allocation10 + $0x38] sm:$0xf]
        %v1743 = vld [vmem:[#allocation10 + $0x3c] sm:$0xf]
        %v1744 = vld [vmem:[%s6] sm:$0x1]
        %v1746 = vlaneseq
        %v1747 = vshrl.u32 %v1746, 7
        %v1748 = vsub.s32 0, %v1747
        %v1749 = vrot.slane %v1744, %v1748
        %v1767 = vunpack.c.l.b16 %v1728
        %v1768 = vunpack.c.l.b16 %v1729
        %v1769 = vunpack.c.l.b16 %v1730
        %v1770 = vunpack.c.l.b16 %v1731
        %v1771 = vunpack.c.l.b16 %v1732
        %v1772 = vunpack.c.l.b16 %v1733
        %v1773 = vunpack.c.l.b16 %v1734
        %v1774 = vunpack.c.l.b16 %v1735
        %v1775 = vunpack.c.l.b16 %v1736
        %v1776 = vunpack.c.l.b16 %v1737
        %v1777 = vunpack.c.l.b16 %v1738
        %v1778 = vunpack.c.l.b16 %v1739
        %v1779 = vunpack.c.l.b16 %v1740
        %v1780 = vunpack.c.l.b16 %v1741
        %v1781 = vunpack.c.l.b16 %v1742
        %v1782 = vunpack.c.l.b16 %v1743
        %v1783 = vpack.c.b16 %v1768, %v1767
        %v1784 = vpack.c.b16 %v1770, %v1769
        %v1785 = vpack.c.b16 %v1772, %v1771
        %v1786 = vpack.c.b16 %v1774, %v1773
        %v1787 = vpack.c.b16 %v1776, %v1775
        %v1788 = vpack.c.b16 %v1778, %v1777
        %v1789 = vpack.c.b16 %v1780, %v1779
        %v1790 = vpack.c.b16 %v1782, %v1781
        %1799 = vmatprep.subr.bf16.mxu0 0
        %1800 = vmatpush1.bf16.msra.mxu0 %v1783
        %1801 = vmatprep.subr.bf16.mxu0 0
        %1802 = vmatpush1.bf16.msra.mxu0 %v1784
        %1803 = vmatprep.subr.bf16.mxu0 0
        %1804 = vmatpush1.bf16.msra.mxu0 %v1785
        %1805 = vmatprep.subr.bf16.mxu0 0
        %1806 = vmatpush1.bf16.msra.mxu0 %v1786
        %1807 = vmatprep.subr.bf16.mxu0 0
        %1808 = vmatpush1.bf16.msra.mxu0 %v1787
        %1809 = vmatprep.subr.bf16.mxu0 0
        %1810 = vmatpush1.bf16.msra.mxu0 %v1788
        %1811 = vmatprep.subr.bf16.mxu0 0
        %1812 = vmatpush1.bf16.msra.mxu0 %v1789
        %1813 = vmatprep.subr.bf16.mxu0 0
        %1814 = vmatpush1.bf16.msra.mxu0 %v1790
        %1815 = vmatprep.subr.bf16.mxu0 0
        %1816 = vmatpush1.bf16.msra.mxu0 0
        %1817 = vmatprep.subr.bf16.mxu0 0
        %1818 = vmatpush1.bf16.msra.mxu0 0
        %1819 = vmatprep.subr.bf16.mxu0 0
        %1820 = vmatpush1.bf16.msra.mxu0 0
        %1821 = vmatprep.subr.bf16.mxu0 0
        %1822 = vmatpush1.bf16.msra.mxu0 0
        %1823 = vmatprep.subr.bf16.mxu0 0
        %1824 = vmatpush1.bf16.msra.mxu0 0
        %1825 = vmatprep.subr.bf16.mxu0 0
        %1826 = vmatpush1.bf16.msra.mxu0 0
        %1827 = vmatprep.subr.bf16.mxu0 0
        %1828 = vmatpush1.bf16.msra.mxu0 0
        %1829 = vmatprep.subr.bf16.mxu0 0
        %1830 = vmatpush1.bf16.msra.mxu0 0
        %1831 = vmatprep.mubr.bf16.mxu0 0
        %1832 = vmatmul.mubr.bf16.gmra.mrb[0].mxu0 %v1720
        %v1833 = vpop.f32.mrb[0].mxu0
        %v1834 = vadd.f32 %v1749, %v1833
        %v1835 = vpop.f32.mrb[0].mxu0
        %v1836 = vpop.f32.mrb[0].mxu0
        %v1837 = vadd.f32 %v1749, %v1836
        %v1838 = vpop.f32.mrb[0].mxu0
        %1839 = vmatprep.mubr.bf16.mxu0 0
        %1840 = vmatmul.mubr.bf16.gmra.mrb[0].mxu0 %v1721
        %v1841 = vpop.f32.mrb[0].mxu0
        %v1842 = vadd.f32 %v1749, %v1841
        %v1843 = vpop.f32.mrb[0].mxu0
        %v1844 = vpop.f32.mrb[0].mxu0
        %v1845 = vadd.f32 %v1749, %v1844
        %v1846 = vpop.f32.mrb[0].mxu0
        %1847 = vmatprep.mubr.bf16.mxu0 0
        %1848 = vmatmul.mubr.bf16.gmra.mrb[0].mxu0 %v1722
        %v1849 = vpop.f32.mrb[0].mxu0
        %v1850 = vadd.f32 %v1749, %v1849
        %v1851 = vpop.f32.mrb[0].mxu0
        %v1852 = vpop.f32.mrb[0].mxu0
        %v1853 = vadd.f32 %v1749, %v1852
        %v1854 = vpop.f32.mrb[0].mxu0
        %1855 = vmatprep.mubr.bf16.mxu0 0
        %1856 = vmatmul.mubr.bf16.gmra.mrb[0].mxu0 %v1723
        %v1857 = vpop.f32.mrb[0].mxu0
        %v1858 = vadd.f32 %v1749, %v1857
        %v1859 = vpop.f32.mrb[0].mxu0
        %v1860 = vpop.f32.mrb[0].mxu0
        %v1861 = vadd.f32 %v1749, %v1860
        %v1862 = vpop.f32.mrb[0].mxu0
        %1863 = vmatprep.mubr.bf16.mxu0 0
        %1864 = vmatmul.mubr.bf16.gmra.mrb[0].mxu0 %v1724
        %v1865 = vpop.f32.mrb[0].mxu0
        %v1866 = vadd.f32 %v1749, %v1865
        %v1867 = vpop.f32.mrb[0].mxu0
        %v1868 = vpop.f32.mrb[0].mxu0
        %v1869 = vadd.f32 %v1749, %v1868
        %v1870 = vpop.f32.mrb[0].mxu0
        %1871 = vmatprep.mubr.bf16.mxu0 0
        %1872 = vmatmul.mubr.bf16.gmra.mrb[0].mxu0 %v1725
        %v1873 = vpop.f32.mrb[0].mxu0
        %v1874 = vadd.f32 %v1749, %v1873
        %v1875 = vpop.f32.mrb[0].mxu0
        %v1876 = vpop.f32.mrb[0].mxu0
        %v1877 = vadd.f32 %v1749, %v1876
        %v1878 = vpop.f32.mrb[0].mxu0
        %1879 = vmatprep.mubr.bf16.mxu0 0
        %1880 = vmatmul.mubr.bf16.gmra.mrb[0].mxu0 %v1726
        %v1881 = vpop.f32.mrb[0].mxu0
        %v1882 = vadd.f32 %v1749, %v1881
        %v1883 = vpop.f32.mrb[0].mxu0
        %v1884 = vpop.f32.mrb[0].mxu0
        %v1885 = vadd.f32 %v1749, %v1884
        %v1886 = vpop.f32.mrb[0].mxu0
        %1887 = vmatprep.mubr.bf16.mxu0 0
        %1888 = vmatmul.mubr.bf16.gmra.mrb[0].mxu0 %v1727
        %v1889 = vpop.f32.mrb[0].mxu0
        %v1890 = vadd.f32 %v1749, %v1889
        %v1891 = vpop.f32.mrb[0].mxu0
        %v1892 = vpop.f32.mrb[0].mxu0
        %v1893 = vadd.f32 %v1749, %v1892
        %v1894 = vpop.f32.mrb[0].mxu0
        %1895 = vdwg.mxu0
        %v1896 = vmax.f32 %v1834, 0.0
        %v1897 = vmax.f32 %v1837, 0.0
        %v1898 = vmax.f32 %v1842, 0.0
        %v1899 = vmax.f32 %v1845, 0.0
        %v1900 = vmax.f32 %v1850, 0.0
        %v1901 = vmax.f32 %v1853, 0.0
        %v1902 = vmax.f32 %v1858, 0.0
        %v1903 = vmax.f32 %v1861, 0.0
        %v1904 = vmax.f32 %v1866, 0.0
        %v1905 = vmax.f32 %v1869, 0.0
        %v1906 = vmax.f32 %v1874, 0.0
        %v1907 = vmax.f32 %v1877, 0.0
        %v1908 = vmax.f32 %v1882, 0.0
        %v1909 = vmax.f32 %v1885, 0.0
        %v1910 = vmax.f32 %v1890, 0.0
        %v1911 = vmax.f32 %v1893, 0.0
        %1912 = vst [vmem:[%s460] sm:$0xff] %v1896
        %1913 = vst [vmem:[%s460 + $0x8] sm:$0xff] %v1897
        %1914 = vst [vmem:[%s460 + $0x10] sm:$0xff] %v1898
        %1915 = vst [vmem:[%s460 + $0x18] sm:$0xff] %v1899
        %1916 = vst [vmem:[%s460 + $0x20] sm:$0xff] %v1900
        %1917 = vst [vmem:[%s460 + $0x28] sm:$0xff] %v1901
        %1918 = vst [vmem:[%s460 + $0x30] sm:$0xff] %v1902
        %1919 = vst [vmem:[%s460 + $0x38] sm:$0xff] %v1903
        %1920 = vst [vmem:[%s460 + $0x40] sm:$0xff] %v1904
        %1921 = vst [vmem:[%s460 + $0x48] sm:$0xff] %v1905
        %1922 = vst [vmem:[%s460 + $0x50] sm:$0xff] %v1906
        %1923 = vst [vmem:[%s460 + $0x58] sm:$0xff] %v1907
        %1924 = vst [vmem:[%s460 + $0x60] sm:$0xff] %v1908
        %1925 = vst [vmem:[%s460 + $0x68] sm:$0xff] %v1909
        %1926 = vst [vmem:[%s460 + $0x70] sm:$0xff] %v1910
        %1927 = vst [vmem:[%s460 + $0x78] sm:$0xff] %v1911
        %v1928 = vadd.f32 %v677, %v1541
        %v1929 = vadd.f32 %v681, %v1545
        %v1930 = vadd.f32 %v687, %v1551
        %v1931 = vadd.f32 %v691, %v1555
        %v1932 = vadd.f32 %v697, %v1561
        %v1933 = vadd.f32 %v701, %v1565
        %v1934 = vadd.f32 %v707, %v1571
        %v1935 = vadd.f32 %v711, %v1575
        %v1936 = vadd.f32 %v717, %v1581
        %v1937 = vadd.f32 %v721, %v1585
        %v1938 = vadd.f32 %v727, %v1591
        %v1939 = vadd.f32 %v731, %v1595
        %v1940 = vadd.f32 %v737, %v1601
        %v1941 = vadd.f32 %v741, %v1605
        %v1942 = vadd.f32 %v747, %v1611
        %v1943 = vadd.f32 %v751, %v1615
        %s1944 = scalar_lea.vmem %s5, 1
        %v1945 = vld [vmem:[%s1944] sm:$0x1]
        %v1947 = vlaneseq
        %v1948 = vshrl.u32 %v1947, 7
        %v1949 = vsub.s32 0, %v1948
        %v1950 = vrot.slane %v1945, %v1949
        %v1952 = vadd.f32 %v1928, %v1950
        %v1953 = vadd.f32 %v1929, %v1950
        %v1954 = vadd.f32 %v1930, %v1950
        %v1955 = vadd.f32 %v1931, %v1950
        %v1956 = vadd.f32 %v1932, %v1950
        %v1957 = vadd.f32 %v1933, %v1950
        %v1958 = vadd.f32 %v1934, %v1950
        %v1959 = vadd.f32 %v1935, %v1950
        %v1960 = vadd.f32 %v1936, %v1950
        %v1961 = vadd.f32 %v1937, %v1950
        %v1962 = vadd.f32 %v1938, %v1950
        %v1963 = vadd.f32 %v1939, %v1950
        %v1964 = vadd.f32 %v1940, %v1950
        %v1965 = vadd.f32 %v1941, %v1950
        %v1966 = vadd.f32 %v1942, %v1950
        %v1967 = vadd.f32 %v1943, %v1950
        %v1968 = vtanh.pop %v1952
        %v1969 = vtanh.pop %v1953
        %v1970 = vtanh.pop %v1954
        %v1971 = vtanh.pop %v1955
        %v1972 = vtanh.pop %v1956
        %v1973 = vtanh.pop %v1957
        %v1974 = vtanh.pop %v1958
        %v1975 = vtanh.pop %v1959
        %v1976 = vtanh.pop %v1960
        %v1977 = vtanh.pop %v1961
        %v1978 = vtanh.pop %v1962
        %v1979 = vtanh.pop %v1963
        %v1980 = vtanh.pop %v1964
        %v1981 = vtanh.pop %v1965
        %v1982 = vtanh.pop %v1966
        %v1983 = vtanh.pop %v1967
        %v1984 = vld [vmem:[%s403] sm:$0xf]
        %v1985 = vld [vmem:[%s403 + $0x4] sm:$0xf]
        %v1986 = vld [vmem:[%s403 + $0x8] sm:$0xf]
        %v1987 = vld [vmem:[%s403 + $0xc] sm:$0xf]
        %v1988 = vld [vmem:[%s403 + $0x10] sm:$0xf]
        %v1989 = vld [vmem:[%s403 + $0x14] sm:$0xf]
        %v1990 = vld [vmem:[%s403 + $0x18] sm:$0xf]
        %v1991 = vld [vmem:[%s403 + $0x1c] sm:$0xf]
        %v1992 = vld [vmem:[%s403 + $0x20] sm:$0xf]
        %v1993 = vld [vmem:[%s403 + $0x24] sm:$0xf]
        %v1994 = vld [vmem:[%s403 + $0x28] sm:$0xf]
        %v1995 = vld [vmem:[%s403 + $0x2c] sm:$0xf]
        %v1996 = vld [vmem:[%s403 + $0x30] sm:$0xf]
        %v1997 = vld [vmem:[%s403 + $0x34] sm:$0xf]
        %v1998 = vld [vmem:[%s403 + $0x38] sm:$0xf]
        %v1999 = vld [vmem:[%s403 + $0x3c] sm:$0xf]
        %v2000 = vunpack.c.l.bf16 %v1984
        %v2001 = vunpack.c.l.bf16 %v1985
        %v2002 = vunpack.c.l.bf16 %v1986
        %v2003 = vunpack.c.l.bf16 %v1987
        %v2004 = vunpack.c.l.bf16 %v1988
        %v2005 = vunpack.c.l.bf16 %v1989
        %v2006 = vunpack.c.l.bf16 %v1990
        %v2007 = vunpack.c.l.bf16 %v1991
        %v2008 = vunpack.c.l.bf16 %v1992
        %v2009 = vunpack.c.l.bf16 %v1993
        %v2010 = vunpack.c.l.bf16 %v1994
        %v2011 = vunpack.c.l.bf16 %v1995
        %v2012 = vunpack.c.l.bf16 %v1996
        %v2013 = vunpack.c.l.bf16 %v1997
        %v2014 = vunpack.c.l.bf16 %v1998
        %v2015 = vunpack.c.l.bf16 %v1999
        %v2016 = vmul.f32 %v1968, %v2000
        %v2017 = vmul.f32 %v1969, %v2001
        %v2018 = vmul.f32 %v1970, %v2002
        %v2019 = vmul.f32 %v1971, %v2003
        %v2020 = vmul.f32 %v1972, %v2004
        %v2021 = vmul.f32 %v1973, %v2005
        %v2022 = vmul.f32 %v1974, %v2006
        %v2023 = vmul.f32 %v1975, %v2007
        %v2024 = vmul.f32 %v1976, %v2008
        %v2025 = vmul.f32 %v1977, %v2009
        %v2026 = vmul.f32 %v1978, %v2010
        %v2027 = vmul.f32 %v1979, %v2011
        %v2028 = vmul.f32 %v1980, %v2012
        %v2029 = vmul.f32 %v1981, %v2013
        %v2030 = vmul.f32 %v1982, %v2014
        %v2031 = vmul.f32 %v1983, %v2015
        %v2032 = vpack.c.bf16 %v2017, %v2016
        %v2033 = vpack.c.bf16 %v2019, %v2018
        %v2034 = vpack.c.bf16 %v2021, %v2020
        %v2035 = vpack.c.bf16 %v2023, %v2022
        %v2036 = vpack.c.bf16 %v2025, %v2024
        %v2037 = vpack.c.bf16 %v2027, %v2026
        %v2038 = vpack.c.bf16 %v2029, %v2028
        %v2039 = vpack.c.bf16 %v2031, %v2030
        %s2040 = scalar_lea.vmem [#allocation10], 64
        %v2041 = vld [vmem:[%s2040] sm:$0xf]
        %v2042 = vld [vmem:[%s2040 + $0x4] sm:$0xf]
        %v2043 = vld [vmem:[%s2040 + $0x8] sm:$0xf]
        %v2044 = vld [vmem:[%s2040 + $0xc] sm:$0xf]
        %v2045 = vld [vmem:[%s2040 + $0x10] sm:$0xf]
        %v2046 = vld [vmem:[%s2040 + $0x14] sm:$0xf]
        %v2047 = vld [vmem:[%s2040 + $0x18] sm:$0xf]
        %v2048 = vld [vmem:[%s2040 + $0x1c] sm:$0xf]
        %v2049 = vld [vmem:[%s2040 + $0x20] sm:$0xf]
        %v2050 = vld [vmem:[%s2040 + $0x24] sm:$0xf]
        %v2051 = vld [vmem:[%s2040 + $0x28] sm:$0xf]
        %v2052 = vld [vmem:[%s2040 + $0x2c] sm:$0xf]
        %v2053 = vld [vmem:[%s2040 + $0x30] sm:$0xf]
        %v2054 = vld [vmem:[%s2040 + $0x34] sm:$0xf]
        %v2055 = vld [vmem:[%s2040 + $0x38] sm:$0xf]
        %v2056 = vld [vmem:[%s2040 + $0x3c] sm:$0xf]
        %s2057 = scalar_lea.vmem %s6, 1
        %v2058 = vld [vmem:[%s2057] sm:$0x1]
        %v2060 = vlaneseq
        %v2061 = vshrl.u32 %v2060, 7
        %v2062 = vsub.s32 0, %v2061
        %v2063 = vrot.slane %v2058, %v2062
        %v2081 = vunpack.c.l.b16 %v2041
        %v2082 = vunpack.c.l.b16 %v2042
        %v2083 = vunpack.c.l.b16 %v2043
        %v2084 = vunpack.c.l.b16 %v2044
        %v2085 = vunpack.c.l.b16 %v2045
        %v2086 = vunpack.c.l.b16 %v2046
        %v2087 = vunpack.c.l.b16 %v2047
        %v2088 = vunpack.c.l.b16 %v2048
        %v2089 = vunpack.c.l.b16 %v2049
        %v2090 = vunpack.c.l.b16 %v2050
        %v2091 = vunpack.c.l.b16 %v2051
        %v2092 = vunpack.c.l.b16 %v2052
        %v2093 = vunpack.c.l.b16 %v2053
        %v2094 = vunpack.c.l.b16 %v2054
        %v2095 = vunpack.c.l.b16 %v2055
        %v2096 = vunpack.c.l.b16 %v2056
        %v2097 = vpack.c.b16 %v2082, %v2081
        %v2098 = vpack.c.b16 %v2084, %v2083
        %v2099 = vpack.c.b16 %v2086, %v2085
        %v2100 = vpack.c.b16 %v2088, %v2087
        %v2101 = vpack.c.b16 %v2090, %v2089
        %v2102 = vpack.c.b16 %v2092, %v2091
        %v2103 = vpack.c.b16 %v2094, %v2093
        %v2104 = vpack.c.b16 %v2096, %v2095
        %2113 = vmatprep.subr.bf16.mxu0 0
        %2114 = vmatpush1.bf16.msra.mxu0 %v2097
        %2115 = vmatprep.subr.bf16.mxu0 0
        %2116 = vmatpush1.bf16.msra.mxu0 %v2098
        %2117 = vmatprep.subr.bf16.mxu0 0
        %2118 = vmatpush1.bf16.msra.mxu0 %v2099
        %2119 = vmatprep.subr.bf16.mxu0 0
        %2120 = vmatpush1.bf16.msra.mxu0 %v2100
        %2121 = vmatprep.subr.bf16.mxu0 0
        %2122 = vmatpush1.bf16.msra.mxu0 %v2101
        %2123 = vmatprep.subr.bf16.mxu0 0
        %2124 = vmatpush1.bf16.msra.mxu0 %v2102
        %2125 = vmatprep.subr.bf16.mxu0 0
        %2126 = vmatpush1.bf16.msra.mxu0 %v2103
        %2127 = vmatprep.subr.bf16.mxu0 0
        %2128 = vmatpush1.bf16.msra.mxu0 %v2104
        %2129 = vmatprep.subr.bf16.mxu0 0
        %2130 = vmatpush1.bf16.msra.mxu0 0
        %2131 = vmatprep.subr.bf16.mxu0 0
        %2132 = vmatpush1.bf16.msra.mxu0 0
        %2133 = vmatprep.subr.bf16.mxu0 0
        %2134 = vmatpush1.bf16.msra.mxu0 0
        %2135 = vmatprep.subr.bf16.mxu0 0
        %2136 = vmatpush1.bf16.msra.mxu0 0
        %2137 = vmatprep.subr.bf16.mxu0 0
        %2138 = vmatpush1.bf16.msra.mxu0 0
        %2139 = vmatprep.subr.bf16.mxu0 0
        %2140 = vmatpush1.bf16.msra.mxu0 0
        %2141 = vmatprep.subr.bf16.mxu0 0
        %2142 = vmatpush1.bf16.msra.mxu0 0
        %2143 = vmatprep.subr.bf16.mxu0 0
        %2144 = vmatpush1.bf16.msra.mxu0 0
        %2145 = vmatprep.mubr.bf16.mxu0 0
        %2146 = vmatmul.mubr.bf16.gmra.mrb[0].mxu0 %v2032
        %v2147 = vpop.f32.mrb[0].mxu0
        %v2148 = vadd.f32 %v2063, %v2147
        %v2149 = vpop.f32.mrb[0].mxu0
        %v2150 = vpop.f32.mrb[0].mxu0
        %v2151 = vadd.f32 %v2063, %v2150
        %v2152 = vpop.f32.mrb[0].mxu0
        %2153 = vmatprep.mubr.bf16.mxu0 0
        %2154 = vmatmul.mubr.bf16.gmra.mrb[0].mxu0 %v2033
        %v2155 = vpop.f32.mrb[0].mxu0
        %v2156 = vadd.f32 %v2063, %v2155
        %v2157 = vpop.f32.mrb[0].mxu0
        %v2158 = vpop.f32.mrb[0].mxu0
        %v2159 = vadd.f32 %v2063, %v2158
        %v2160 = vpop.f32.mrb[0].mxu0
        %2161 = vmatprep.mubr.bf16.mxu0 0
        %2162 = vmatmul.mubr.bf16.gmra.mrb[0].mxu0 %v2034
        %v2163 = vpop.f32.mrb[0].mxu0
        %v2164 = vadd.f32 %v2063, %v2163
        %v2165 = vpop.f32.mrb[0].mxu0
        %v2166 = vpop.f32.mrb[0].mxu0
        %v2167 = vadd.f32 %v2063, %v2166
        %v2168 = vpop.f32.mrb[0].mxu0
        %2169 = vmatprep.mubr.bf16.mxu0 0
        %2170 = vmatmul.mubr.bf16.gmra.mrb[0].mxu0 %v2035
        %v2171 = vpop.f32.mrb[0].mxu0
        %v2172 = vadd.f32 %v2063, %v2171
        %v2173 = vpop.f32.mrb[0].mxu0
        %v2174 = vpop.f32.mrb[0].mxu0
        %v2175 = vadd.f32 %v2063, %v2174
        %v2176 = vpop.f32.mrb[0].mxu0
        %2177 = vmatprep.mubr.bf16.mxu0 0
        %2178 = vmatmul.mubr.bf16.gmra.mrb[0].mxu0 %v2036
        %v2179 = vpop.f32.mrb[0].mxu0
        %v2180 = vadd.f32 %v2063, %v2179
        %v2181 = vpop.f32.mrb[0].mxu0
        %v2182 = vpop.f32.mrb[0].mxu0
        %v2183 = vadd.f32 %v2063, %v2182
        %v2184 = vpop.f32.mrb[0].mxu0
        %2185 = vmatprep.mubr.bf16.mxu0 0
        %2186 = vmatmul.mubr.bf16.gmra.mrb[0].mxu0 %v2037
        %v2187 = vpop.f32.mrb[0].mxu0
        %v2188 = vadd.f32 %v2063, %v2187
        %v2189 = vpop.f32.mrb[0].mxu0
        %v2190 = vpop.f32.mrb[0].mxu0
        %v2191 = vadd.f32 %v2063, %v2190
        %v2192 = vpop.f32.mrb[0].mxu0
        %2193 = vmatprep.mubr.bf16.mxu0 0
        %2194 = vmatmul.mubr.bf16.gmra.mrb[0].mxu0 %v2038
        %v2195 = vpop.f32.mrb[0].mxu0
        %v2196 = vadd.f32 %v2063, %v2195
        %v2197 = vpop.f32.mrb[0].mxu0
        %v2198 = vpop.f32.mrb[0].mxu0
        %v2199 = vadd.f32 %v2063, %v2198
        %v2200 = vpop.f32.mrb[0].mxu0
        %2201 = vmatprep.mubr.bf16.mxu0 0
        %2202 = vmatmul.mubr.bf16.gmra.mrb[0].mxu0 %v2039
        %v2203 = vpop.f32.mrb[0].mxu0
        %v2204 = vadd.f32 %v2063, %v2203
        %v2205 = vpop.f32.mrb[0].mxu0
        %v2206 = vpop.f32.mrb[0].mxu0
        %v2207 = vadd.f32 %v2063, %v2206
        %v2208 = vpop.f32.mrb[0].mxu0
        %2209 = vdwg.mxu0
        %v2210 = vmax.f32 %v2148, 0.0
        %v2211 = vmax.f32 %v2151, 0.0
        %v2212 = vmax.f32 %v2156, 0.0
        %v2213 = vmax.f32 %v2159, 0.0
        %v2214 = vmax.f32 %v2164, 0.0
        %v2215 = vmax.f32 %v2167, 0.0
        %v2216 = vmax.f32 %v2172, 0.0
        %v2217 = vmax.f32 %v2175, 0.0
        %v2218 = vmax.f32 %v2180, 0.0
        %v2219 = vmax.f32 %v2183, 0.0
        %v2220 = vmax.f32 %v2188, 0.0
        %v2221 = vmax.f32 %v2191, 0.0
        %v2222 = vmax.f32 %v2196, 0.0
        %v2223 = vmax.f32 %v2199, 0.0
        %v2224 = vmax.f32 %v2204, 0.0
        %v2225 = vmax.f32 %v2207, 0.0
        %2226 = vst [vmem:[%s467] sm:$0xff] %v2210
        %2227 = vst [vmem:[%s467 + $0x8] sm:$0xff] %v2211
        %2228 = vst [vmem:[%s467 + $0x10] sm:$0xff] %v2212
        %2229 = vst [vmem:[%s467 + $0x18] sm:$0xff] %v2213
        %2230 = vst [vmem:[%s467 + $0x20] sm:$0xff] %v2214
        %2231 = vst [vmem:[%s467 + $0x28] sm:$0xff] %v2215
        %2232 = vst [vmem:[%s467 + $0x30] sm:$0xff] %v2216
        %2233 = vst [vmem:[%s467 + $0x38] sm:$0xff] %v2217
        %2234 = vst [vmem:[%s467 + $0x40] sm:$0xff] %v2218
        %2235 = vst [vmem:[%s467 + $0x48] sm:$0xff] %v2219
        %2236 = vst [vmem:[%s467 + $0x50] sm:$0xff] %v2220
        %2237 = vst [vmem:[%s467 + $0x58] sm:$0xff] %v2221
        %2238 = vst [vmem:[%s467 + $0x60] sm:$0xff] %v2222
        %2239 = vst [vmem:[%s467 + $0x68] sm:$0xff] %v2223
        %2240 = vst [vmem:[%s467 + $0x70] sm:$0xff] %v2224
        %2241 = vst [vmem:[%s467 + $0x78] sm:$0xff] %v2225
        %s2242 = sand.u32 %s204, 1
        %s2243 = scalar_lea.sflag [#allocation4], %s2242
        %s2244 = sand.u32 %s204, 1
        %s2245 = smul.addr %s2244, 128
        %s2246 = scalar_lea.vmem [#allocation11], %s2245
        %s2247 = sand.u32 %s34, 1
        %s2248 = scalar_lea.sflag [#allocation13], %s2247
        %s2249 = sand.u32 %s230, 1
        %s2250 = smul.addr %s2249, 128
        %s2251 = scalar_lea.vmem [#allocation12], %s2250
        %s2252 = sand.u32 %s34, 1
        %s2253 = scalar_lea.sflag [#allocation13], %s2252
        %s2254 = sand.u32 %s256, 1
        %s2255 = smul.addr %s2254, 128
        %s2256 = scalar_lea.vmem [#allocation14], %s2255
        // Predicated region
        $region69: #{tpu_custom_call.1} parent=47 // pred_check
          %p2257 = pneg %p214
        $region70: #{tpu_custom_call.1} parent=47 // pred_check_branch
          %2259 = sbr.rel (%p2257) target = $region72
        $region71: #{tpu_custom_call.1} parent=47 // pred_region
          %s2260 = smul.u32 16, %s34
          %s2262 = ssub.s32 2048, 2048
          %2263 = vsyncadd %s2243, %s2262
          %s2264 = smul.addr %s2260, 128
          %s2265 = scalar_lea.hbm %s7, %s2264
          %s2266 = sshll.u32 %s2246, 4
          %s2267 = int_to_ptr.vmem [resolvable:$true] %s2266
          %2272 = dma.vmem_to_hbm [thread:$0]  %s2267, 2048, %s2265, %s2243, 128, 128, 8
        $region72: #{tpu_custom_call.1} parent=47 // pred_fallthru
          _
        // Predicated region
        $region73: #{tpu_custom_call.1} parent=47 // pred_check
          %p2273 = pneg %p240
        $region74: #{tpu_custom_call.1} parent=47 // pred_check_branch
          %2275 = sbr.rel (%p2273) target = $region76
        $region75: #{tpu_custom_call.1} parent=47 // pred_region
          %s2276 = smul.u32 16, %s34
          %s2278 = ssub.s32 2048, 2048
          %2279 = vsyncadd %s2248, %s2278
          %s2280 = smul.addr %s2276, 128
          %s2281 = scalar_lea.hbm %s8, %s2280
          %s2282 = sshll.u32 %s2251, 4
          %s2283 = int_to_ptr.vmem [resolvable:$true] %s2282
          %2288 = dma.vmem_to_hbm [thread:$0]  %s2283, 2048, %s2281, %s2248, 128, 128, 8
        $region76: #{tpu_custom_call.1} parent=47 // pred_fallthru
          _
        // Predicated region
        $region77: #{tpu_custom_call.1} parent=47 // pred_check
          %p2289 = pneg %p266
        $region78: #{tpu_custom_call.1} parent=47 // pred_check_branch
          %2291 = sbr.rel (%p2289) target = $region80
        $region79: #{tpu_custom_call.1} parent=47 // pred_region
          %s2292 = smul.u32 16, %s34
          %s2294 = ssub.s32 2048, 2048
          %2295 = vsyncadd %s2253, %s2294
          %s2296 = smul.addr %s2292, 128
          %s2297 = scalar_lea.hbm %s9, %s2296
          %s2298 = sshll.u32 %s2256, 4
          %s2299 = int_to_ptr.vmem [resolvable:$true] %s2298
          %2304 = dma.vmem_to_hbm [thread:$0]  %s2299, 2048, %s2297, %s2253, 128, 128, 8
        $region80: #{tpu_custom_call.1} parent=47 // pred_fallthru
          _
      $region48: #{tpu_custom_call.1} parent=5 // pred_fallthru
        _
      %p2305 = scmp.le.s32.totalorder 2, %s29
      // Predicated region
      $region81: #{tpu_custom_call.1} parent=5 // pred_check
        %p2306 = pneg %p2305
      $region82: #{tpu_custom_call.1} parent=5 // pred_check_branch
        %2308 = sbr.rel (%p2306) target = $region84
      $region83: #{tpu_custom_call.1} parent=5 // pred_region
        %s2309 = ssub.s32 %s29, 2
        // Predicated region
        $region85: #{tpu_custom_call.1} parent=83 // pred_check
          %p2310 = pneg %p220
        $region86: #{tpu_custom_call.1} parent=83 // pred_check_branch
          %2312 = sbr.rel (%p2310) target = $region88
        $region87: #{tpu_custom_call.1} parent=83 // pred_region
          %s2313 = sand.u32 %s205, 1
          %s2314 = scalar_lea.sflag [#allocation4], %s2313
          %s2315 = sand.u32 %s205, 1
          %s2316 = smul.addr %s2315, 128
          %s2317 = scalar_lea.vmem [#allocation11], %s2316
          %2318 = dma.done %s2314, 2048
        $region88: #{tpu_custom_call.1} parent=83 // pred_fallthru
          _
        // Predicated region
        $region89: #{tpu_custom_call.1} parent=83 // pred_check
          %p2319 = pneg %p246
        $region90: #{tpu_custom_call.1} parent=83 // pred_check_branch
          %2321 = sbr.rel (%p2319) target = $region92
        $region91: #{tpu_custom_call.1} parent=83 // pred_region
          %s2322 = sand.u32 %s35, 1
          %s2323 = scalar_lea.sflag [#allocation13], %s2322
          %s2324 = sand.u32 %s231, 1
          %s2325 = smul.addr %s2324, 128
          %s2326 = scalar_lea.vmem [#allocation12], %s2325
          %2327 = dma.done %s2323, 2048
        $region92: #{tpu_custom_call.1} parent=83 // pred_fallthru
          _
        // Predicated region
        $region93: #{tpu_custom_call.1} parent=83 // pred_check
          %p2328 = pneg %p272
        $region94: #{tpu_custom_call.1} parent=83 // pred_check_branch
          %2330 = sbr.rel (%p2328) target = $region96
        $region95: #{tpu_custom_call.1} parent=83 // pred_region
          %s2331 = sand.u32 %s35, 1
          %s2332 = scalar_lea.sflag [#allocation13], %s2331
          %s2333 = sand.u32 %s257, 1
          %s2334 = smul.addr %s2333, 128
          %s2335 = scalar_lea.vmem [#allocation14], %s2334
          %2336 = dma.done %s2332, 2048
        $region96: #{tpu_custom_call.1} parent=83 // pred_fallthru
          _
      $region84: #{tpu_custom_call.1} parent=5 // pred_fallthru
        _
    $region6: #{tpu_custom_call.1} parent=1 // loop_footer
      %s33 = sadd.s32 1, %s29
    $region7: #{tpu_custom_call.1} parent=1 // loop_footer_branch
      %28 = sbr.rel target = $region3
    $region8: #{tpu_custom_call.1} parent=1 // loop_exit
      _
    %2337 = vsyncpa [#allocation3], 1
    %s2338 = scalar_lea.sflag [#allocation3], 1
    %2339 = vsyncpa %s2338, 1
    %2340 = vsyncpa [#allocation6], 1
    %s2341 = scalar_lea.sflag [#allocation6], 1
    %2342 = vsyncpa %s2341, 1
    %2343 = vsyncpa [#allocation9], 1
    %2344 = vsyncpa [#allocation4], 1
    %s2345 = scalar_lea.sflag [#allocation4], 1
    %2346 = vsyncpa %s2345, 1
    %2347 = vsyncpa [#allocation13], 1
    %s2348 = scalar_lea.sflag [#allocation13], 1
    %2349 = vsyncpa %s2348, 1

</llo_original>
